<compile_context>
chip_gen: v7x
topology: tpu7x:2x2x1
jax: 0.10.0
libtpu: 0.0.40
codegen_flags: <defaults>
</compile_context>

<pallas_src>
import jax
import jax.numpy as jnp
import numpy as np
from jax.experimental import pallas as pl
from jax.experimental.pallas import tpu as pltpu  # noqa: F401  (TPU backend)

# ---- sizes (small, consistent with the module) ----
VOCAB = 32          # input_size == output_size == len(chars)
V_PAD = 128         # lane-dense padded logits width
HIDDEN = 128        # hidden_size (scaled down from 512; lane/MXU friendly)
NUM_LAYERS = 4
BATCH = 2
SEQ = 8


def char_rnn_kernel(embp_ref, h0_ref, whh0_ref, wcat_ref, bcat_ref,
                    wfc_ref, bfc_ref, out_ref, hout_ref):
    # embp_ref : (SEQ, BATCH, H)   time-major, already = x_emb @ Wih0 + b0
    # h0_ref   : (L, BATCH, H)
    # whh0_ref : (H, H)            layer-0 recurrent weight (pre-transposed)
    # wcat_ref : (L-1, 2H, H)      fused [Wih; Whh] for layers 1..L-1
    # bcat_ref : (L-1, 1, H)       fused biases for layers 1..L-1
    # wfc_ref  : (H, V_PAD)        zero-padded FC weight
    # bfc_ref  : (1, V_PAD)        zero-padded FC bias
    # out_ref  : (SEQ*BATCH, V_PAD) logits, row index = t*BATCH + b
    # hout_ref : (L, BATCH, H)

    # Hoist all invariant loads out of the (unrolled) time loop.
    whh0 = whh0_ref[...]
    wcats = [wcat_ref[l] for l in range(NUM_LAYERS - 1)]
    bcats = [bcat_ref[l] for l in range(NUM_LAYERS - 1)]
    wfc = wfc_ref[...]
    bfc = bfc_ref[...]

    # Hidden states stay in SSA values for the whole kernel.
    h = [h0_ref[l] for l in range(NUM_LAYERS)]

    tops = []
    for t in range(SEQ):                       # fully unrolled, SEQ is static
        x_t = embp_ref[t]                      # (B, H): x@Wih0 + b0 precomputed
        h[0] = jnp.tanh(
            jnp.dot(h[0], whh0, preferred_element_type=jnp.float32) + x_t)
        inp = h[0]
        for l in range(1, NUM_LAYERS):
            cat = jnp.concatenate([inp, h[l]], axis=-1)        # (B, 2H)
            h[l] = jnp.tanh(
                jnp.dot(cat, wcats[l - 1],
                        preferred_element_type=jnp.float32) + bcats[l - 1])
            inp = h[l]
        tops.append(inp)                       # (B, H)

    # Final hidden state: one bulk write per layer, after the loop.
    for l in range(NUM_LAYERS):
        hout_ref[l] = h[l]

    # Single FC matmul over all timesteps + one lane-dense store.
    top = jnp.concatenate(tops, axis=0)        # (SEQ*B, H), row = t*B + b
    out_ref[...] = (
        jnp.dot(top, wfc, preferred_element_type=jnp.float32) + bfc)


def char_rnn_forward(x_ids, hidden, params):
    """Mirrors CharRNN.forward: returns (logits (B*S, V), hidden (L, B, H))."""
    emb_table, wih, whh, bias, wfc, bfc = params

    # Fold the layer-0 input projection + bias into the embedding table (exact:
    # gather-of-rows commutes with the matmul).  One tiny (V,H)@(H,H) matmul.
    proj_table = emb_table @ wih[0] + bias[0]            # (V, H)
    embp = jnp.take(proj_table, x_ids, axis=0)           # (B, S, H)
    embp_tm = jnp.transpose(embp, (1, 0, 2))             # (S, B, H) time-major

    # Fuse per-layer input/recurrent weights for layers 1..L-1: [Wih; Whh].
    wcat = jnp.concatenate([wih[1:], whh[1:]], axis=1)   # (L-1, 2H, H)
    bcat = bias[1:]                                      # (L-1, 1, H)

    # Lane-dense FC: pad VOCAB -> 128 columns (zeros), slice back afterwards.
    wfc_pad = jnp.zeros((HIDDEN, V_PAD), jnp.float32).at[:, :VOCAB].set(wfc)
    bfc_pad = jnp.zeros((1, V_PAD), jnp.float32).at[:, :VOCAB].set(bfc)

    out_flat, h_out = pl.pallas_call(
        char_rnn_kernel,
        out_shape=(
            jax.ShapeDtypeStruct((SEQ * BATCH, V_PAD), jnp.float32),
            jax.ShapeDtypeStruct((NUM_LAYERS, BATCH, HIDDEN), jnp.float32),
        ),
    )(embp_tm, hidden, whh[0], wcat, bcat, wfc_pad, bfc_pad)

    # Kernel rows are t-major (t*B + b); PyTorch's view(-1, H) is b-major
    # (b*S + t), so transpose and slice off the padded vocab columns.
    logits = (out_flat.reshape(SEQ, BATCH, V_PAD)
              .transpose(1, 0, 2)[:, :, :VOCAB]
              .reshape(BATCH * SEQ, VOCAB))
    return logits, h_out


def reference_forward(x_ids, hidden, params):
    """Pure-JAX reference of the PyTorch semantics."""
    emb_table, wih, whh, bias, wfc, bfc = params
    emb = jnp.take(emb_table, x_ids, axis=0)             # (B, S, H)
    h = [hidden[l] for l in range(NUM_LAYERS)]
    outs = []
    for t in range(SEQ):
        inp = emb[:, t, :]
        for l in range(NUM_LAYERS):
            h[l] = jnp.tanh(inp @ wih[l] + h[l] @ whh[l] + bias[l])
            inp = h[l]
        outs.append(inp)
    out = jnp.stack(outs, axis=1)                        # (B, S, H)
    logits = out.reshape(-1, HIDDEN) @ wfc + bfc         # (B*S, V)
    return logits, jnp.stack(h, axis=0)


def make_params(key):
    ks = jax.random.split(key, 6)
    scale = 1.0 / np.sqrt(HIDDEN)
    emb_table = jax.random.uniform(ks[0], (VOCAB, HIDDEN), jnp.float32, -scale, scale)
    wih = jax.random.uniform(ks[1], (NUM_LAYERS, HIDDEN, HIDDEN), jnp.float32, -scale, scale)
    whh = jax.random.uniform(ks[2], (NUM_LAYERS, HIDDEN, HIDDEN), jnp.float32, -scale, scale)
    bias = jax.random.uniform(ks[3], (NUM_LAYERS, 1, HIDDEN), jnp.float32, -scale, scale)
    wfc = jax.random.uniform(ks[4], (HIDDEN, VOCAB), jnp.float32, -scale, scale)
    bfc = jax.random.uniform(ks[5], (1, VOCAB), jnp.float32, -scale, scale)
    return (emb_table, wih, whh, bias, wfc, bfc)


if __name__ == "__main__":
    key = jax.random.PRNGKey(0)
    k_param, k_x, k_h = jax.random.split(key, 3)

    params = make_params(k_param)
    x_ids = jax.random.randint(k_x, (BATCH, SEQ), 0, VOCAB, dtype=jnp.int32)
    hidden0 = jax.random.normal(k_h, (NUM_LAYERS, BATCH, HIDDEN), jnp.float32)

    logits, h_out = jax.jit(char_rnn_forward)(x_ids, hidden0, params)
    logits = jax.block_until_ready(logits)
    h_out = jax.block_until_ready(h_out)

    ref_logits, ref_h = reference_forward(x_ids, hidden0, params)
    # Slightly relaxed tolerance: the fused K=256 matmul / folded layer-0
    # projection change f32 accumulation order vs. the two-matmul reference.
    np.testing.assert_allclose(np.asarray(logits), np.asarray(ref_logits),
                               rtol=1e-4, atol=1e-4)
    np.testing.assert_allclose(np.asarray(h_out), np.asarray(ref_h),
                               rtol=1e-4, atol=1e-4)

    print("KERNEL_OK")
</pallas_src>

<mosaic_0001>
module attributes {stable_mosaic.version = 11 : i64} {
  func.func @char_rnn_kernel(%arg0: memref<8x2x128xf32, #tpu.memory_space<vmem>>, %arg1: memref<4x2x128xf32, #tpu.memory_space<vmem>>, %arg2: memref<128x128xf32, #tpu.memory_space<vmem>>, %arg3: memref<3x256x128xf32, #tpu.memory_space<vmem>>, %arg4: memref<3x1x128xf32, #tpu.memory_space<vmem>>, %arg5: memref<128x128xf32, #tpu.memory_space<vmem>>, %arg6: memref<1x128xf32, #tpu.memory_space<vmem>>, %arg7: memref<16x128xf32, #tpu.memory_space<vmem>>, %arg8: memref<4x2x128xf32, #tpu.memory_space<vmem>>) attributes {dimension_semantics = [], scalar_prefetch = 0 : i64, scratch_operands = 0 : i64, tpu.core_type = #tpu.core_type<tc>} {
    %c0 = arith.constant 0 : index
    %c0_0 = arith.constant 0 : index
    %0 = vector.load %arg2[%c0, %c0_0] : memref<128x128xf32, #tpu.memory_space<vmem>>, vector<128x128xf32>
    %c0_1 = arith.constant 0 : index
    %c0_2 = arith.constant 0 : index
    %c0_3 = arith.constant 0 : index
    %1 = vector.load %arg3[%c0_1, %c0_2, %c0_3] : memref<3x256x128xf32, #tpu.memory_space<vmem>>, vector<1x256x128xf32>
    %2 = vector.shape_cast %1 : vector<1x256x128xf32> to vector<256x128xf32>
    %c1 = arith.constant 1 : index
    %c0_4 = arith.constant 0 : index
    %c0_5 = arith.constant 0 : index
    %3 = vector.load %arg3[%c1, %c0_4, %c0_5] : memref<3x256x128xf32, #tpu.memory_space<vmem>>, vector<1x256x128xf32>
    %4 = vector.shape_cast %3 : vector<1x256x128xf32> to vector<256x128xf32>
    %c2 = arith.constant 2 : index
    %c0_6 = arith.constant 0 : index
    %c0_7 = arith.constant 0 : index
    %5 = vector.load %arg3[%c2, %c0_6, %c0_7] : memref<3x256x128xf32, #tpu.memory_space<vmem>>, vector<1x256x128xf32>
    %6 = vector.shape_cast %5 : vector<1x256x128xf32> to vector<256x128xf32>
    %c0_8 = arith.constant 0 : index
    %c0_9 = arith.constant 0 : index
    %c0_10 = arith.constant 0 : index
    %7 = vector.load %arg4[%c0_8, %c0_9, %c0_10] : memref<3x1x128xf32, #tpu.memory_space<vmem>>, vector<1x1x128xf32>
    %8 = vector.shape_cast %7 : vector<1x1x128xf32> to vector<1x128xf32>
    %c1_11 = arith.constant 1 : index
    %c0_12 = arith.constant 0 : index
    %c0_13 = arith.constant 0 : index
    %9 = vector.load %arg4[%c1_11, %c0_12, %c0_13] : memref<3x1x128xf32, #tpu.memory_space<vmem>>, vector<1x1x128xf32>
    %10 = vector.shape_cast %9 : vector<1x1x128xf32> to vector<1x128xf32>
    %c2_14 = arith.constant 2 : index
    %c0_15 = arith.constant 0 : index
    %c0_16 = arith.constant 0 : index
    %11 = vector.load %arg4[%c2_14, %c0_15, %c0_16] : memref<3x1x128xf32, #tpu.memory_space<vmem>>, vector<1x1x128xf32>
    %12 = vector.shape_cast %11 : vector<1x1x128xf32> to vector<1x128xf32>
    %c0_17 = arith.constant 0 : index
    %c0_18 = arith.constant 0 : index
    %13 = vector.load %arg5[%c0_17, %c0_18] : memref<128x128xf32, #tpu.memory_space<vmem>>, vector<128x128xf32>
    %c0_19 = arith.constant 0 : index
    %c0_20 = arith.constant 0 : index
    %14 = vector.load %arg6[%c0_19, %c0_20] : memref<1x128xf32, #tpu.memory_space<vmem>>, vector<1x128xf32>
    %c0_21 = arith.constant 0 : index
    %c0_22 = arith.constant 0 : index
    %c0_23 = arith.constant 0 : index
    %15 = vector.load %arg1[%c0_21, %c0_22, %c0_23] : memref<4x2x128xf32, #tpu.memory_space<vmem>>, vector<1x2x128xf32>
    %16 = vector.shape_cast %15 : vector<1x2x128xf32> to vector<2x128xf32>
    %c1_24 = arith.constant 1 : index
    %c0_25 = arith.constant 0 : index
    %c0_26 = arith.constant 0 : index
    %17 = vector.load %arg1[%c1_24, %c0_25, %c0_26] : memref<4x2x128xf32, #tpu.memory_space<vmem>>, vector<1x2x128xf32>
    %18 = vector.shape_cast %17 : vector<1x2x128xf32> to vector<2x128xf32>
    %c2_27 = arith.constant 2 : index
    %c0_28 = arith.constant 0 : index
    %c0_29 = arith.constant 0 : index
    %19 = vector.load %arg1[%c2_27, %c0_28, %c0_29] : memref<4x2x128xf32, #tpu.memory_space<vmem>>, vector<1x2x128xf32>
    %20 = vector.shape_cast %19 : vector<1x2x128xf32> to vector<2x128xf32>
    %c3 = arith.constant 3 : index
    %c0_30 = arith.constant 0 : index
    %c0_31 = arith.constant 0 : index
    %21 = vector.load %arg1[%c3, %c0_30, %c0_31] : memref<4x2x128xf32, #tpu.memory_space<vmem>>, vector<1x2x128xf32>
    %22 = vector.shape_cast %21 : vector<1x2x128xf32> to vector<2x128xf32>
    %c0_32 = arith.constant 0 : index
    %c0_33 = arith.constant 0 : index
    %c0_34 = arith.constant 0 : index
    %23 = vector.load %arg0[%c0_32, %c0_33, %c0_34] : memref<8x2x128xf32, #tpu.memory_space<vmem>>, vector<1x2x128xf32>
    %24 = vector.shape_cast %23 : vector<1x2x128xf32> to vector<2x128xf32>
    %cst = arith.constant dense<0.000000e+00> : vector<2x128xf32>
    %25 = tpu.matmul %16, %0, %cst {dimension_numbers = #tpu.dot_dimension_numbers<[1], [0], [0], [1], [0, 0, 1, 1], [], []>} : vector<2x128xf32>, vector<128x128xf32>, vector<2x128xf32> -> vector<2x128xf32>
    %26 = arith.addf %25, %24 : vector<2x128xf32>
    %27 = math.tanh %26 : vector<2x128xf32>
    %28 = tpu.concatenate %27, %18 in 1 : vector<2x128xf32>, vector<2x128xf32> -> vector<2x256xf32>
    %cst_35 = arith.constant dense<0.000000e+00> : vector<2x128xf32>
    %29 = tpu.matmul %28, %2, %cst_35 {dimension_numbers = #tpu.dot_dimension_numbers<[1], [0], [0], [1], [0, 0, 1, 1], [], []>} : vector<2x256xf32>, vector<256x128xf32>, vector<2x128xf32> -> vector<2x128xf32>
    %30 = vector.broadcast %8 : vector<1x128xf32> to vector<2x128xf32>
    %31 = arith.addf %29, %30 : vector<2x128xf32>
    %32 = math.tanh %31 : vector<2x128xf32>
    %33 = tpu.concatenate %32, %20 in 1 : vector<2x128xf32>, vector<2x128xf32> -> vector<2x256xf32>
    %cst_36 = arith.constant dense<0.000000e+00> : vector<2x128xf32>
    %34 = tpu.matmul %33, %4, %cst_36 {dimension_numbers = #tpu.dot_dimension_numbers<[1], [0], [0], [1], [0, 0, 1, 1], [], []>} : vector<2x256xf32>, vector<256x128xf32>, vector<2x128xf32> -> vector<2x128xf32>
    %35 = vector.broadcast %10 : vector<1x128xf32> to vector<2x128xf32>
    %36 = arith.addf %34, %35 : vector<2x128xf32>
    %37 = math.tanh %36 : vector<2x128xf32>
    %38 = tpu.concatenate %37, %22 in 1 : vector<2x128xf32>, vector<2x128xf32> -> vector<2x256xf32>
    %cst_37 = arith.constant dense<0.000000e+00> : vector<2x128xf32>
    %39 = tpu.matmul %38, %6, %cst_37 {dimension_numbers = #tpu.dot_dimension_numbers<[1], [0], [0], [1], [0, 0, 1, 1], [], []>} : vector<2x256xf32>, vector<256x128xf32>, vector<2x128xf32> -> vector<2x128xf32>
    %40 = vector.broadcast %12 : vector<1x128xf32> to vector<2x128xf32>
    %41 = arith.addf %39, %40 : vector<2x128xf32>
    %42 = math.tanh %41 : vector<2x128xf32>
    %c1_38 = arith.constant 1 : index
    %c0_39 = arith.constant 0 : index
    %c0_40 = arith.constant 0 : index
    %43 = vector.load %arg0[%c1_38, %c0_39, %c0_40] : memref<8x2x128xf32, #tpu.memory_space<vmem>>, vector<1x2x128xf32>
    %44 = vector.shape_cast %43 : vector<1x2x128xf32> to vector<2x128xf32>
    %cst_41 = arith.constant dense<0.000000e+00> : vector<2x128xf32>
    %45 = tpu.matmul %27, %0, %cst_41 {dimension_numbers = #tpu.dot_dimension_numbers<[1], [0], [0], [1], [0, 0, 1, 1], [], []>} : vector<2x128xf32>, vector<128x128xf32>, vector<2x128xf32> -> vector<2x128xf32>
    %46 = arith.addf %45, %44 : vector<2x128xf32>
    %47 = math.tanh %46 : vector<2x128xf32>
    %48 = tpu.concatenate %47, %32 in 1 : vector<2x128xf32>, vector<2x128xf32> -> vector<2x256xf32>
    %cst_42 = arith.constant dense<0.000000e+00> : vector<2x128xf32>
    %49 = tpu.matmul %48, %2, %cst_42 {dimension_numbers = #tpu.dot_dimension_numbers<[1], [0], [0], [1], [0, 0, 1, 1], [], []>} : vector<2x256xf32>, vector<256x128xf32>, vector<2x128xf32> -> vector<2x128xf32>
    %50 = vector.broadcast %8 : vector<1x128xf32> to vector<2x128xf32>
    %51 = arith.addf %49, %50 : vector<2x128xf32>
    %52 = math.tanh %51 : vector<2x128xf32>
    %53 = tpu.concatenate %52, %37 in 1 : vector<2x128xf32>, vector<2x128xf32> -> vector<2x256xf32>
    %cst_43 = arith.constant dense<0.000000e+00> : vector<2x128xf32>
    %54 = tpu.matmul %53, %4, %cst_43 {dimension_numbers = #tpu.dot_dimension_numbers<[1], [0], [0], [1], [0, 0, 1, 1], [], []>} : vector<2x256xf32>, vector<256x128xf32>, vector<2x128xf32> -> vector<2x128xf32>
    %55 = vector.broadcast %10 : vector<1x128xf32> to vector<2x128xf32>
    %56 = arith.addf %54, %55 : vector<2x128xf32>
    %57 = math.tanh %56 : vector<2x128xf32>
    %58 = tpu.concatenate %57, %42 in 1 : vector<2x128xf32>, vector<2x128xf32> -> vector<2x256xf32>
    %cst_44 = arith.constant dense<0.000000e+00> : vector<2x128xf32>
    %59 = tpu.matmul %58, %6, %cst_44 {dimension_numbers = #tpu.dot_dimension_numbers<[1], [0], [0], [1], [0, 0, 1, 1], [], []>} : vector<2x256xf32>, vector<256x128xf32>, vector<2x128xf32> -> vector<2x128xf32>
    %60 = vector.broadcast %12 : vector<1x128xf32> to vector<2x128xf32>
    %61 = arith.addf %59, %60 : vector<2x128xf32>
    %62 = math.tanh %61 : vector<2x128xf32>
    %c2_45 = arith.constant 2 : index
    %c0_46 = arith.constant 0 : index
    %c0_47 = arith.constant 0 : index
    %63 = vector.load %arg0[%c2_45, %c0_46, %c0_47] : memref<8x2x128xf32, #tpu.memory_space<vmem>>, vector<1x2x128xf32>
    %64 = vector.shape_cast %63 : vector<1x2x128xf32> to vector<2x128xf32>
    %cst_48 = arith.constant dense<0.000000e+00> : vector<2x128xf32>
    %65 = tpu.matmul %47, %0, %cst_48 {dimension_numbers = #tpu.dot_dimension_numbers<[1], [0], [0], [1], [0, 0, 1, 1], [], []>} : vector<2x128xf32>, vector<128x128xf32>, vector<2x128xf32> -> vector<2x128xf32>
    %66 = arith.addf %65, %64 : vector<2x128xf32>
    %67 = math.tanh %66 : vector<2x128xf32>
    %68 = tpu.concatenate %67, %52 in 1 : vector<2x128xf32>, vector<2x128xf32> -> vector<2x256xf32>
    %cst_49 = arith.constant dense<0.000000e+00> : vector<2x128xf32>
    %69 = tpu.matmul %68, %2, %cst_49 {dimension_numbers = #tpu.dot_dimension_numbers<[1], [0], [0], [1], [0, 0, 1, 1], [], []>} : vector<2x256xf32>, vector<256x128xf32>, vector<2x128xf32> -> vector<2x128xf32>
    %70 = vector.broadcast %8 : vector<1x128xf32> to vector<2x128xf32>
    %71 = arith.addf %69, %70 : vector<2x128xf32>
    %72 = math.tanh %71 : vector<2x128xf32>
    %73 = tpu.concatenate %72, %57 in 1 : vector<2x128xf32>, vector<2x128xf32> -> vector<2x256xf32>
    %cst_50 = arith.constant dense<0.000000e+00> : vector<2x128xf32>
    %74 = tpu.matmul %73, %4, %cst_50 {dimension_numbers = #tpu.dot_dimension_numbers<[1], [0], [0], [1], [0, 0, 1, 1], [], []>} : vector<2x256xf32>, vector<256x128xf32>, vector<2x128xf32> -> vector<2x128xf32>
    %75 = vector.broadcast %10 : vector<1x128xf32> to vector<2x128xf32>
    %76 = arith.addf %74, %75 : vector<2x128xf32>
    %77 = math.tanh %76 : vector<2x128xf32>
    %78 = tpu.concatenate %77, %62 in 1 : vector<2x128xf32>, vector<2x128xf32> -> vector<2x256xf32>
    %cst_51 = arith.constant dense<0.000000e+00> : vector<2x128xf32>
    %79 = tpu.matmul %78, %6, %cst_51 {dimension_numbers = #tpu.dot_dimension_numbers<[1], [0], [0], [1], [0, 0, 1, 1], [], []>} : vector<2x256xf32>, vector<256x128xf32>, vector<2x128xf32> -> vector<2x128xf32>
    %80 = vector.broadcast %12 : vector<1x128xf32> to vector<2x128xf32>
    %81 = arith.addf %79, %80 : vector<2x128xf32>
    %82 = math.tanh %81 : vector<2x128xf32>
    %c3_52 = arith.constant 3 : index
    %c0_53 = arith.constant 0 : index
    %c0_54 = arith.constant 0 : index
    %83 = vector.load %arg0[%c3_52, %c0_53, %c0_54] : memref<8x2x128xf32, #tpu.memory_space<vmem>>, vector<1x2x128xf32>
    %84 = vector.shape_cast %83 : vector<1x2x128xf32> to vector<2x128xf32>
    %cst_55 = arith.constant dense<0.000000e+00> : vector<2x128xf32>
    %85 = tpu.matmul %67, %0, %cst_55 {dimension_numbers = #tpu.dot_dimension_numbers<[1], [0], [0], [1], [0, 0, 1, 1], [], []>} : vector<2x128xf32>, vector<128x128xf32>, vector<2x128xf32> -> vector<2x128xf32>
    %86 = arith.addf %85, %84 : vector<2x128xf32>
    %87 = math.tanh %86 : vector<2x128xf32>
    %88 = tpu.concatenate %87, %72 in 1 : vector<2x128xf32>, vector<2x128xf32> -> vector<2x256xf32>
    %cst_56 = arith.constant dense<0.000000e+00> : vector<2x128xf32>
    %89 = tpu.matmul %88, %2, %cst_56 {dimension_numbers = #tpu.dot_dimension_numbers<[1], [0], [0], [1], [0, 0, 1, 1], [], []>} : vector<2x256xf32>, vector<256x128xf32>, vector<2x128xf32> -> vector<2x128xf32>
    %90 = vector.broadcast %8 : vector<1x128xf32> to vector<2x128xf32>
    %91 = arith.addf %89, %90 : vector<2x128xf32>
    %92 = math.tanh %91 : vector<2x128xf32>
    %93 = tpu.concatenate %92, %77 in 1 : vector<2x128xf32>, vector<2x128xf32> -> vector<2x256xf32>
    %cst_57 = arith.constant dense<0.000000e+00> : vector<2x128xf32>
    %94 = tpu.matmul %93, %4, %cst_57 {dimension_numbers = #tpu.dot_dimension_numbers<[1], [0], [0], [1], [0, 0, 1, 1], [], []>} : vector<2x256xf32>, vector<256x128xf32>, vector<2x128xf32> -> vector<2x128xf32>
    %95 = vector.broadcast %10 : vector<1x128xf32> to vector<2x128xf32>
    %96 = arith.addf %94, %95 : vector<2x128xf32>
    %97 = math.tanh %96 : vector<2x128xf32>
    %98 = tpu.concatenate %97, %82 in 1 : vector<2x128xf32>, vector<2x128xf32> -> vector<2x256xf32>
    %cst_58 = arith.constant dense<0.000000e+00> : vector<2x128xf32>
    %99 = tpu.matmul %98, %6, %cst_58 {dimension_numbers = #tpu.dot_dimension_numbers<[1], [0], [0], [1], [0, 0, 1, 1], [], []>} : vector<2x256xf32>, vector<256x128xf32>, vector<2x128xf32> -> vector<2x128xf32>
    %100 = vector.broadcast %12 : vector<1x128xf32> to vector<2x128xf32>
    %101 = arith.addf %99, %100 : vector<2x128xf32>
    %102 = math.tanh %101 : vector<2x128xf32>
    %c4 = arith.constant 4 : index
    %c0_59 = arith.constant 0 : index
    %c0_60 = arith.constant 0 : index
    %103 = vector.load %arg0[%c4, %c0_59, %c0_60] : memref<8x2x128xf32, #tpu.memory_space<vmem>>, vector<1x2x128xf32>
    %104 = vector.shape_cast %103 : vector<1x2x128xf32> to vector<2x128xf32>
    %cst_61 = arith.constant dense<0.000000e+00> : vector<2x128xf32>
    %105 = tpu.matmul %87, %0, %cst_61 {dimension_numbers = #tpu.dot_dimension_numbers<[1], [0], [0], [1], [0, 0, 1, 1], [], []>} : vector<2x128xf32>, vector<128x128xf32>, vector<2x128xf32> -> vector<2x128xf32>
    %106 = arith.addf %105, %104 : vector<2x128xf32>
    %107 = math.tanh %106 : vector<2x128xf32>
    %108 = tpu.concatenate %107, %92 in 1 : vector<2x128xf32>, vector<2x128xf32> -> vector<2x256xf32>
    %cst_62 = arith.constant dense<0.000000e+00> : vector<2x128xf32>
    %109 = tpu.matmul %108, %2, %cst_62 {dimension_numbers = #tpu.dot_dimension_numbers<[1], [0], [0], [1], [0, 0, 1, 1], [], []>} : vector<2x256xf32>, vector<256x128xf32>, vector<2x128xf32> -> vector<2x128xf32>
    %110 = vector.broadcast %8 : vector<1x128xf32> to vector<2x128xf32>
    %111 = arith.addf %109, %110 : vector<2x128xf32>
    %112 = math.tanh %111 : vector<2x128xf32>
    %113 = tpu.concatenate %112, %97 in 1 : vector<2x128xf32>, vector<2x128xf32> -> vector<2x256xf32>
    %cst_63 = arith.constant dense<0.000000e+00> : vector<2x128xf32>
    %114 = tpu.matmul %113, %4, %cst_63 {dimension_numbers = #tpu.dot_dimension_numbers<[1], [0], [0], [1], [0, 0, 1, 1], [], []>} : vector<2x256xf32>, vector<256x128xf32>, vector<2x128xf32> -> vector<2x128xf32>
    %115 = vector.broadcast %10 : vector<1x128xf32> to vector<2x128xf32>
    %116 = arith.addf %114, %115 : vector<2x128xf32>
    %117 = math.tanh %116 : vector<2x128xf32>
    %118 = tpu.concatenate %117, %102 in 1 : vector<2x128xf32>, vector<2x128xf32> -> vector<2x256xf32>
    %cst_64 = arith.constant dense<0.000000e+00> : vector<2x128xf32>
    %119 = tpu.matmul %118, %6, %cst_64 {dimension_numbers = #tpu.dot_dimension_numbers<[1], [0], [0], [1], [0, 0, 1, 1], [], []>} : vector<2x256xf32>, vector<256x128xf32>, vector<2x128xf32> -> vector<2x128xf32>
    %120 = vector.broadcast %12 : vector<1x128xf32> to vector<2x128xf32>
    %121 = arith.addf %119, %120 : vector<2x128xf32>
    %122 = math.tanh %121 : vector<2x128xf32>
    %c5 = arith.constant 5 : index
    %c0_65 = arith.constant 0 : index
    %c0_66 = arith.constant 0 : index
    %123 = vector.load %arg0[%c5, %c0_65, %c0_66] : memref<8x2x128xf32, #tpu.memory_space<vmem>>, vector<1x2x128xf32>
    %124 = vector.shape_cast %123 : vector<1x2x128xf32> to vector<2x128xf32>
    %cst_67 = arith.constant dense<0.000000e+00> : vector<2x128xf32>
    %125 = tpu.matmul %107, %0, %cst_67 {dimension_numbers = #tpu.dot_dimension_numbers<[1], [0], [0], [1], [0, 0, 1, 1], [], []>} : vector<2x128xf32>, vector<128x128xf32>, vector<2x128xf32> -> vector<2x128xf32>
    %126 = arith.addf %125, %124 : vector<2x128xf32>
    %127 = math.tanh %126 : vector<2x128xf32>
    %128 = tpu.concatenate %127, %112 in 1 : vector<2x128xf32>, vector<2x128xf32> -> vector<2x256xf32>
    %cst_68 = arith.constant dense<0.000000e+00> : vector<2x128xf32>
    %129 = tpu.matmul %128, %2, %cst_68 {dimension_numbers = #tpu.dot_dimension_numbers<[1], [0], [0], [1], [0, 0, 1, 1], [], []>} : vector<2x256xf32>, vector<256x128xf32>, vector<2x128xf32> -> vector<2x128xf32>
    %130 = vector.broadcast %8 : vector<1x128xf32> to vector<2x128xf32>
    %131 = arith.addf %129, %130 : vector<2x128xf32>
    %132 = math.tanh %131 : vector<2x128xf32>
    %133 = tpu.concatenate %132, %117 in 1 : vector<2x128xf32>, vector<2x128xf32> -> vector<2x256xf32>
    %cst_69 = arith.constant dense<0.000000e+00> : vector<2x128xf32>
    %134 = tpu.matmul %133, %4, %cst_69 {dimension_numbers = #tpu.dot_dimension_numbers<[1], [0], [0], [1], [0, 0, 1, 1], [], []>} : vector<2x256xf32>, vector<256x128xf32>, vector<2x128xf32> -> vector<2x128xf32>
    %135 = vector.broadcast %10 : vector<1x128xf32> to vector<2x128xf32>
    %136 = arith.addf %134, %135 : vector<2x128xf32>
    %137 = math.tanh %136 : vector<2x128xf32>
    %138 = tpu.concatenate %137, %122 in 1 : vector<2x128xf32>, vector<2x128xf32> -> vector<2x256xf32>
    %cst_70 = arith.constant dense<0.000000e+00> : vector<2x128xf32>
    %139 = tpu.matmul %138, %6, %cst_70 {dimension_numbers = #tpu.dot_dimension_numbers<[1], [0], [0], [1], [0, 0, 1, 1], [], []>} : vector<2x256xf32>, vector<256x128xf32>, vector<2x128xf32> -> vector<2x128xf32>
    %140 = vector.broadcast %12 : vector<1x128xf32> to vector<2x128xf32>
    %141 = arith.addf %139, %140 : vector<2x128xf32>
    %142 = math.tanh %141 : vector<2x128xf32>
    %c6 = arith.constant 6 : index
    %c0_71 = arith.constant 0 : index
    %c0_72 = arith.constant 0 : index
    %143 = vector.load %arg0[%c6, %c0_71, %c0_72] : memref<8x2x128xf32, #tpu.memory_space<vmem>>, vector<1x2x128xf32>
    %144 = vector.shape_cast %143 : vector<1x2x128xf32> to vector<2x128xf32>
    %cst_73 = arith.constant dense<0.000000e+00> : vector<2x128xf32>
    %145 = tpu.matmul %127, %0, %cst_73 {dimension_numbers = #tpu.dot_dimension_numbers<[1], [0], [0], [1], [0, 0, 1, 1], [], []>} : vector<2x128xf32>, vector<128x128xf32>, vector<2x128xf32> -> vector<2x128xf32>
    %146 = arith.addf %145, %144 : vector<2x128xf32>
    %147 = math.tanh %146 : vector<2x128xf32>
    %148 = tpu.concatenate %147, %132 in 1 : vector<2x128xf32>, vector<2x128xf32> -> vector<2x256xf32>
    %cst_74 = arith.constant dense<0.000000e+00> : vector<2x128xf32>
    %149 = tpu.matmul %148, %2, %cst_74 {dimension_numbers = #tpu.dot_dimension_numbers<[1], [0], [0], [1], [0, 0, 1, 1], [], []>} : vector<2x256xf32>, vector<256x128xf32>, vector<2x128xf32> -> vector<2x128xf32>
    %150 = vector.broadcast %8 : vector<1x128xf32> to vector<2x128xf32>
    %151 = arith.addf %149, %150 : vector<2x128xf32>
    %152 = math.tanh %151 : vector<2x128xf32>
    %153 = tpu.concatenate %152, %137 in 1 : vector<2x128xf32>, vector<2x128xf32> -> vector<2x256xf32>
    %cst_75 = arith.constant dense<0.000000e+00> : vector<2x128xf32>
    %154 = tpu.matmul %153, %4, %cst_75 {dimension_numbers = #tpu.dot_dimension_numbers<[1], [0], [0], [1], [0, 0, 1, 1], [], []>} : vector<2x256xf32>, vector<256x128xf32>, vector<2x128xf32> -> vector<2x128xf32>
    %155 = vector.broadcast %10 : vector<1x128xf32> to vector<2x128xf32>
    %156 = arith.addf %154, %155 : vector<2x128xf32>
    %157 = math.tanh %156 : vector<2x128xf32>
    %158 = tpu.concatenate %157, %142 in 1 : vector<2x128xf32>, vector<2x128xf32> -> vector<2x256xf32>
    %cst_76 = arith.constant dense<0.000000e+00> : vector<2x128xf32>
    %159 = tpu.matmul %158, %6, %cst_76 {dimension_numbers = #tpu.dot_dimension_numbers<[1], [0], [0], [1], [0, 0, 1, 1], [], []>} : vector<2x256xf32>, vector<256x128xf32>, vector<2x128xf32> -> vector<2x128xf32>
    %160 = vector.broadcast %12 : vector<1x128xf32> to vector<2x128xf32>
    %161 = arith.addf %159, %160 : vector<2x128xf32>
    %162 = math.tanh %161 : vector<2x128xf32>
    %c7 = arith.constant 7 : index
    %c0_77 = arith.constant 0 : index
    %c0_78 = arith.constant 0 : index
    %163 = vector.load %arg0[%c7, %c0_77, %c0_78] : memref<8x2x128xf32, #tpu.memory_space<vmem>>, vector<1x2x128xf32>
    %164 = vector.shape_cast %163 : vector<1x2x128xf32> to vector<2x128xf32>
    %cst_79 = arith.constant dense<0.000000e+00> : vector<2x128xf32>
    %165 = tpu.matmul %147, %0, %cst_79 {dimension_numbers = #tpu.dot_dimension_numbers<[1], [0], [0], [1], [0, 0, 1, 1], [], []>} : vector<2x128xf32>, vector<128x128xf32>, vector<2x128xf32> -> vector<2x128xf32>
    %166 = arith.addf %165, %164 : vector<2x128xf32>
    %167 = math.tanh %166 : vector<2x128xf32>
    %168 = tpu.concatenate %167, %152 in 1 : vector<2x128xf32>, vector<2x128xf32> -> vector<2x256xf32>
    %cst_80 = arith.constant dense<0.000000e+00> : vector<2x128xf32>
    %169 = tpu.matmul %168, %2, %cst_80 {dimension_numbers = #tpu.dot_dimension_numbers<[1], [0], [0], [1], [0, 0, 1, 1], [], []>} : vector<2x256xf32>, vector<256x128xf32>, vector<2x128xf32> -> vector<2x128xf32>
    %170 = vector.broadcast %8 : vector<1x128xf32> to vector<2x128xf32>
    %171 = arith.addf %169, %170 : vector<2x128xf32>
    %172 = math.tanh %171 : vector<2x128xf32>
    %173 = tpu.concatenate %172, %157 in 1 : vector<2x128xf32>, vector<2x128xf32> -> vector<2x256xf32>
    %cst_81 = arith.constant dense<0.000000e+00> : vector<2x128xf32>
    %174 = tpu.matmul %173, %4, %cst_81 {dimension_numbers = #tpu.dot_dimension_numbers<[1], [0], [0], [1], [0, 0, 1, 1], [], []>} : vector<2x256xf32>, vector<256x128xf32>, vector<2x128xf32> -> vector<2x128xf32>
    %175 = vector.broadcast %10 : vector<1x128xf32> to vector<2x128xf32>
    %176 = arith.addf %174, %175 : vector<2x128xf32>
    %177 = math.tanh %176 : vector<2x128xf32>
    %178 = tpu.concatenate %177, %162 in 1 : vector<2x128xf32>, vector<2x128xf32> -> vector<2x256xf32>
    %cst_82 = arith.constant dense<0.000000e+00> : vector<2x128xf32>
    %179 = tpu.matmul %178, %6, %cst_82 {dimension_numbers = #tpu.dot_dimension_numbers<[1], [0], [0], [1], [0, 0, 1, 1], [], []>} : vector<2x256xf32>, vector<256x128xf32>, vector<2x128xf32> -> vector<2x128xf32>
    %180 = vector.broadcast %12 : vector<1x128xf32> to vector<2x128xf32>
    %181 = arith.addf %179, %180 : vector<2x128xf32>
    %182 = math.tanh %181 : vector<2x128xf32>
    %c0_83 = arith.constant 0 : index
    %c0_84 = arith.constant 0 : index
    %c0_85 = arith.constant 0 : index
    %183 = vector.load %arg8[%c0_83, %c0_84, %c0_85] : memref<4x2x128xf32, #tpu.memory_space<vmem>>, vector<1x2x128xf32>
    %184 = vector.shape_cast %183 : vector<1x2x128xf32> to vector<2x128xf32>
    %185 = vector.shape_cast %167 : vector<2x128xf32> to vector<1x2x128xf32>
    tpu.vector_store %arg8[%c0_83, %c0_84, %c0_85], %185 {strides = array<i32>} : memref<4x2x128xf32, #tpu.memory_space<vmem>>, vector<1x2x128xf32>,
    %c1_86 = arith.constant 1 : index
    %c0_87 = arith.constant 0 : index
    %c0_88 = arith.constant 0 : index
    %186 = vector.load %arg8[%c1_86, %c0_87, %c0_88] : memref<4x2x128xf32, #tpu.memory_space<vmem>>, vector<1x2x128xf32>
    %187 = vector.shape_cast %186 : vector<1x2x128xf32> to vector<2x128xf32>
    %188 = vector.shape_cast %172 : vector<2x128xf32> to vector<1x2x128xf32>
    tpu.vector_store %arg8[%c1_86, %c0_87, %c0_88], %188 {strides = array<i32>} : memref<4x2x128xf32, #tpu.memory_space<vmem>>, vector<1x2x128xf32>,
    %c2_89 = arith.constant 2 : index
    %c0_90 = arith.constant 0 : index
    %c0_91 = arith.constant 0 : index
    %189 = vector.load %arg8[%c2_89, %c0_90, %c0_91] : memref<4x2x128xf32, #tpu.memory_space<vmem>>, vector<1x2x128xf32>
    %190 = vector.shape_cast %189 : vector<1x2x128xf32> to vector<2x128xf32>
    %191 = vector.shape_cast %177 : vector<2x128xf32> to vector<1x2x128xf32>
    tpu.vector_store %arg8[%c2_89, %c0_90, %c0_91], %191 {strides = array<i32>} : memref<4x2x128xf32, #tpu.memory_space<vmem>>, vector<1x2x128xf32>,
    %c3_92 = arith.constant 3 : index
    %c0_93 = arith.constant 0 : index
    %c0_94 = arith.constant 0 : index
    %192 = vector.load %arg8[%c3_92, %c0_93, %c0_94] : memref<4x2x128xf32, #tpu.memory_space<vmem>>, vector<1x2x128xf32>
    %193 = vector.shape_cast %192 : vector<1x2x128xf32> to vector<2x128xf32>
    %194 = vector.shape_cast %182 : vector<2x128xf32> to vector<1x2x128xf32>
    tpu.vector_store %arg8[%c3_92, %c0_93, %c0_94], %194 {strides = array<i32>} : memref<4x2x128xf32, #tpu.memory_space<vmem>>, vector<1x2x128xf32>,
    %195 = tpu.concatenate %42, %62, %82, %102, %122, %142, %162, %182 in 0 : vector<2x128xf32>, vector<2x128xf32>, vector<2x128xf32>, vector<2x128xf32>, vector<2x128xf32>, vector<2x128xf32>, vector<2x128xf32>, vector<2x128xf32> -> vector<16x128xf32>
    %cst_95 = arith.constant dense<0.000000e+00> : vector<16x128xf32>
    %196 = tpu.matmul %195, %13, %cst_95 {dimension_numbers = #tpu.dot_dimension_numbers<[1], [0], [0], [1], [0, 0, 1, 1], [], []>} : vector<16x128xf32>, vector<128x128xf32>, vector<16x128xf32> -> vector<16x128xf32>
    %197 = vector.broadcast %14 : vector<1x128xf32> to vector<16x128xf32>
    %198 = arith.addf %196, %197 : vector<16x128xf32>
    %c0_96 = arith.constant 0 : index
    %c0_97 = arith.constant 0 : index
    %199 = vector.load %arg7[%c0_96, %c0_97] : memref<16x128xf32, #tpu.memory_space<vmem>>, vector<16x128xf32>
    tpu.vector_store %arg7[%c0_96, %c0_97], %198 {strides = array<i32>} : memref<16x128xf32, #tpu.memory_space<vmem>>, vector<16x128xf32>,
    return
  }
}

</mosaic_0001>

<llo_original>
// kernel: char_rnn_forward.1
$region0: #{char_rnn_forward.1}
  #allocation0 [shape = 'u32[]', space=smem, size = 0x4, offset = 0x4, fixed_abs, tag = 'smem constant byte address 0x4 - core index']
  #allocation1 [shape = 'u32[144,128]{1,0:T(1,128)}', space=vmem, size = 0x12000, scoped, tag = 'internal scratch']
  %s0 = inlined_call_operand.vmem [shape: f32[8,2,128], index: 0, kind: input, shape index: {}]
  %s1 = inlined_call_operand.vmem [shape: f32[4,2,128], index: 1, kind: input, shape index: {}]
  %s2 = inlined_call_operand.vmem [shape: f32[128,128], index: 2, kind: input, shape index: {}]
  %s3 = inlined_call_operand.vmem [shape: f32[3,256,128], index: 3, kind: input, shape index: {}]
  %s4 = inlined_call_operand.vmem [shape: f32[3,1,128], index: 4, kind: input, shape index: {}]
  %s5 = inlined_call_operand.vmem [shape: f32[128,128], index: 5, kind: input, shape index: {}]
  %s6 = inlined_call_operand.vmem [shape: f32[1,128], index: 6, kind: input, shape index: {}]
  %s7 = inlined_call_operand.vmem [shape: f32[16,128], index: 7, kind: output, shape index: {0}]
  %s8 = inlined_call_operand.hbm [shape: f32[4,2,128], index: 8, kind: output, shape index: {1}]
  %9 = xla_tuple %s7, %s8
  %s10 = sld [smem:[#allocation0]]
  $region46: #{char_rnn_forward.1} parent=0
    _
  %s12 = ssub.s32 1, %s10
  %s13 = scalar_select 0, %s12, %s10
  $region1: #{char_rnn_forward.1} parent=0
    #allocation2 [shape = 'u8[4096]{0}', space=vmem, size = 0x1000, scoped, tag = 'output window, operand 1, single buffered']
    #allocation3 [shape = 's32[1]{0}', space=sflag, size = 0x4, scoped, tag = 'scoped memory for char_rnn_forward.1']
    %14 = vsyncpa [#allocation3], 0
    // Predicated region
    $region2: #{char_rnn_forward.1} parent=1 // pred_check
      _
    $region3: #{char_rnn_forward.1} parent=1 // pred_check_branch
      %16 = sbr.rel (0) target = $region5
    $region4: #{char_rnn_forward.1} parent=1 // pred_region
      _
    $region5: #{char_rnn_forward.1} parent=1 // pred_fallthru
      _
    // Predicated region
    $region6: #{char_rnn_forward.1} parent=1 // pred_check
      _
    $region7: #{char_rnn_forward.1} parent=1 // pred_check_branch
      %18 = sbr.rel (0) target = $region9
    $region8: #{char_rnn_forward.1} parent=1 // pred_region
      _
    $region9: #{char_rnn_forward.1} parent=1 // pred_fallthru
      _
    // Predicated region
    $region10: #{char_rnn_forward.1} parent=1 // pred_check
      _
    $region11: #{char_rnn_forward.1} parent=1 // pred_check_branch
      %20 = sbr.rel (0) target = $region13
    $region12: #{char_rnn_forward.1} parent=1 // pred_region
      _
    $region13: #{char_rnn_forward.1} parent=1 // pred_fallthru
      _
    // Predicated region
    $region14: #{char_rnn_forward.1} parent=1 // pred_check
      _
    $region15: #{char_rnn_forward.1} parent=1 // pred_check_branch
      %22 = sbr.rel (0) target = $region17
    $region16: #{char_rnn_forward.1} parent=1 // pred_region
      _
    $region17: #{char_rnn_forward.1} parent=1 // pred_fallthru
      _
    // Predicated region
    $region18: #{char_rnn_forward.1} parent=1 // pred_check
      _
    $region19: #{char_rnn_forward.1} parent=1 // pred_check_branch
      %24 = sbr.rel (0) target = $region21
    $region20: #{char_rnn_forward.1} parent=1 // pred_region
      _
    $region21: #{char_rnn_forward.1} parent=1 // pred_fallthru
      _
    // Predicated region
    $region22: #{char_rnn_forward.1} parent=1 // pred_check
      _
    $region23: #{char_rnn_forward.1} parent=1 // pred_check_branch
      %26 = sbr.rel (0) target = $region25
    $region24: #{char_rnn_forward.1} parent=1 // pred_region
      _
    $region25: #{char_rnn_forward.1} parent=1 // pred_fallthru
      _
    // Predicated region
    $region26: #{char_rnn_forward.1} parent=1 // pred_check
      _
    $region27: #{char_rnn_forward.1} parent=1 // pred_check_branch
      %28 = sbr.rel (0) target = $region29
    $region28: #{char_rnn_forward.1} parent=1 // pred_region
      _
    $region29: #{char_rnn_forward.1} parent=1 // pred_fallthru
      _
    %v29 = vld [vmem:[%s2] sm:$0xff]
    %v30 = vld [vmem:[%s2 + $0x8] sm:$0xff]
    %v31 = vld [vmem:[%s2 + $0x10] sm:$0xff]
    %v32 = vld [vmem:[%s2 + $0x18] sm:$0xff]
    %v33 = vld [vmem:[%s2 + $0x20] sm:$0xff]
    %v34 = vld [vmem:[%s2 + $0x28] sm:$0xff]
    %v35 = vld [vmem:[%s2 + $0x30] sm:$0xff]
    %v36 = vld [vmem:[%s2 + $0x38] sm:$0xff]
    %v37 = vld [vmem:[%s2 + $0x40] sm:$0xff]
    %v38 = vld [vmem:[%s2 + $0x48] sm:$0xff]
    %v39 = vld [vmem:[%s2 + $0x50] sm:$0xff]
    %v40 = vld [vmem:[%s2 + $0x58] sm:$0xff]
    %v41 = vld [vmem:[%s2 + $0x60] sm:$0xff]
    %v42 = vld [vmem:[%s2 + $0x68] sm:$0xff]
    %v43 = vld [vmem:[%s2 + $0x70] sm:$0xff]
    %v44 = vld [vmem:[%s2 + $0x78] sm:$0xff]
    %v45 = vld [vmem:[%s3] sm:$0xff]
    %v46 = vld [vmem:[%s3 + $0x8] sm:$0xff]
    %v47 = vld [vmem:[%s3 + $0x10] sm:$0xff]
    %v48 = vld [vmem:[%s3 + $0x18] sm:$0xff]
    %v49 = vld [vmem:[%s3 + $0x20] sm:$0xff]
    %v50 = vld [vmem:[%s3 + $0x28] sm:$0xff]
    %v51 = vld [vmem:[%s3 + $0x30] sm:$0xff]
    %v52 = vld [vmem:[%s3 + $0x38] sm:$0xff]
    %v53 = vld [vmem:[%s3 + $0x40] sm:$0xff]
    %v54 = vld [vmem:[%s3 + $0x48] sm:$0xff]
    %v55 = vld [vmem:[%s3 + $0x50] sm:$0xff]
    %v56 = vld [vmem:[%s3 + $0x58] sm:$0xff]
    %v57 = vld [vmem:[%s3 + $0x60] sm:$0xff]
    %v58 = vld [vmem:[%s3 + $0x68] sm:$0xff]
    %v59 = vld [vmem:[%s3 + $0x70] sm:$0xff]
    %v60 = vld [vmem:[%s3 + $0x78] sm:$0xff]
    %v61 = vld [vmem:[%s3 + $0x80] sm:$0xff]
    %v62 = vld [vmem:[%s3 + $0x88] sm:$0xff]
    %v63 = vld [vmem:[%s3 + $0x90] sm:$0xff]
    %v64 = vld [vmem:[%s3 + $0x98] sm:$0xff]
    %v65 = vld [vmem:[%s3 + $0xa0] sm:$0xff]
    %v66 = vld [vmem:[%s3 + $0xa8] sm:$0xff]
    %v67 = vld [vmem:[%s3 + $0xb0] sm:$0xff]
    %v68 = vld [vmem:[%s3 + $0xb8] sm:$0xff]
    %v69 = vld [vmem:[%s3 + $0xc0] sm:$0xff]
    %v70 = vld [vmem:[%s3 + $0xc8] sm:$0xff]
    %v71 = vld [vmem:[%s3 + $0xd0] sm:$0xff]
    %v72 = vld [vmem:[%s3 + $0xd8] sm:$0xff]
    %v73 = vld [vmem:[%s3 + $0xe0] sm:$0xff]
    %v74 = vld [vmem:[%s3 + $0xe8] sm:$0xff]
    %v75 = vld [vmem:[%s3 + $0xf0] sm:$0xff]
    %v76 = vld [vmem:[%s3 + $0xf8] sm:$0xff]
    %s77 = scalar_lea.vmem %s3, 256
    %v78 = vld [vmem:[%s77] sm:$0xff]
    %v79 = vld [vmem:[%s77 + $0x8] sm:$0xff]
    %v80 = vld [vmem:[%s77 + $0x10] sm:$0xff]
    %v81 = vld [vmem:[%s77 + $0x18] sm:$0xff]
    %v82 = vld [vmem:[%s77 + $0x20] sm:$0xff]
    %v83 = vld [vmem:[%s77 + $0x28] sm:$0xff]
    %v84 = vld [vmem:[%s77 + $0x30] sm:$0xff]
    %v85 = vld [vmem:[%s77 + $0x38] sm:$0xff]
    %v86 = vld [vmem:[%s77 + $0x40] sm:$0xff]
    %v87 = vld [vmem:[%s77 + $0x48] sm:$0xff]
    %v88 = vld [vmem:[%s77 + $0x50] sm:$0xff]
    %v89 = vld [vmem:[%s77 + $0x58] sm:$0xff]
    %v90 = vld [vmem:[%s77 + $0x60] sm:$0xff]
    %v91 = vld [vmem:[%s77 + $0x68] sm:$0xff]
    %v92 = vld [vmem:[%s77 + $0x70] sm:$0xff]
    %v93 = vld [vmem:[%s77 + $0x78] sm:$0xff]
    %v94 = vld [vmem:[%s77 + $0x80] sm:$0xff]
    %v95 = vld [vmem:[%s77 + $0x88] sm:$0xff]
    %v96 = vld [vmem:[%s77 + $0x90] sm:$0xff]
    %v97 = vld [vmem:[%s77 + $0x98] sm:$0xff]
    %v98 = vld [vmem:[%s77 + $0xa0] sm:$0xff]
    %v99 = vld [vmem:[%s77 + $0xa8] sm:$0xff]
    %v100 = vld [vmem:[%s77 + $0xb0] sm:$0xff]
    %v101 = vld [vmem:[%s77 + $0xb8] sm:$0xff]
    %v102 = vld [vmem:[%s77 + $0xc0] sm:$0xff]
    %v103 = vld [vmem:[%s77 + $0xc8] sm:$0xff]
    %v104 = vld [vmem:[%s77 + $0xd0] sm:$0xff]
    %v105 = vld [vmem:[%s77 + $0xd8] sm:$0xff]
    %v106 = vld [vmem:[%s77 + $0xe0] sm:$0xff]
    %v107 = vld [vmem:[%s77 + $0xe8] sm:$0xff]
    %v108 = vld [vmem:[%s77 + $0xf0] sm:$0xff]
    %v109 = vld [vmem:[%s77 + $0xf8] sm:$0xff]
    %s110 = scalar_lea.vmem %s3, 512
    %v111 = vld [vmem:[%s110] sm:$0xff]
    %v112 = vld [vmem:[%s110 + $0x8] sm:$0xff]
    %v113 = vld [vmem:[%s110 + $0x10] sm:$0xff]
    %v114 = vld [vmem:[%s110 + $0x18] sm:$0xff]
    %v115 = vld [vmem:[%s110 + $0x20] sm:$0xff]
    %v116 = vld [vmem:[%s110 + $0x28] sm:$0xff]
    %v117 = vld [vmem:[%s110 + $0x30] sm:$0xff]
    %v118 = vld [vmem:[%s110 + $0x38] sm:$0xff]
    %v119 = vld [vmem:[%s110 + $0x40] sm:$0xff]
    %v120 = vld [vmem:[%s110 + $0x48] sm:$0xff]
    %v121 = vld [vmem:[%s110 + $0x50] sm:$0xff]
    %v122 = vld [vmem:[%s110 + $0x58] sm:$0xff]
    %v123 = vld [vmem:[%s110 + $0x60] sm:$0xff]
    %v124 = vld [vmem:[%s110 + $0x68] sm:$0xff]
    %v125 = vld [vmem:[%s110 + $0x70] sm:$0xff]
    %v126 = vld [vmem:[%s110 + $0x78] sm:$0xff]
    %v127 = vld [vmem:[%s110 + $0x80] sm:$0xff]
    %v128 = vld [vmem:[%s110 + $0x88] sm:$0xff]
    %v129 = vld [vmem:[%s110 + $0x90] sm:$0xff]
    %v130 = vld [vmem:[%s110 + $0x98] sm:$0xff]
    %v131 = vld [vmem:[%s110 + $0xa0] sm:$0xff]
    %v132 = vld [vmem:[%s110 + $0xa8] sm:$0xff]
    %v133 = vld [vmem:[%s110 + $0xb0] sm:$0xff]
    %v134 = vld [vmem:[%s110 + $0xb8] sm:$0xff]
    %v135 = vld [vmem:[%s110 + $0xc0] sm:$0xff]
    %v136 = vld [vmem:[%s110 + $0xc8] sm:$0xff]
    %v137 = vld [vmem:[%s110 + $0xd0] sm:$0xff]
    %v138 = vld [vmem:[%s110 + $0xd8] sm:$0xff]
    %v139 = vld [vmem:[%s110 + $0xe0] sm:$0xff]
    %v140 = vld [vmem:[%s110 + $0xe8] sm:$0xff]
    %v141 = vld [vmem:[%s110 + $0xf0] sm:$0xff]
    %v142 = vld [vmem:[%s110 + $0xf8] sm:$0xff]
    %v143 = vld [vmem:[%s4] sm:$0x1]
    %s144 = scalar_lea.vmem %s4, 1
    %v145 = vld [vmem:[%s144] sm:$0x1]
    %s146 = scalar_lea.vmem %s4, 2
    %v147 = vld [vmem:[%s146] sm:$0x1]
    %v148 = vld [vmem:[%s5] sm:$0xff]
    %v149 = vld [vmem:[%s5 + $0x8] sm:$0xff]
    %v150 = vld [vmem:[%s5 + $0x10] sm:$0xff]
    %v151 = vld [vmem:[%s5 + $0x18] sm:$0xff]
    %v152 = vld [vmem:[%s5 + $0x20] sm:$0xff]
    %v153 = vld [vmem:[%s5 + $0x28] sm:$0xff]
    %v154 = vld [vmem:[%s5 + $0x30] sm:$0xff]
    %v155 = vld [vmem:[%s5 + $0x38] sm:$0xff]
    %v156 = vld [vmem:[%s5 + $0x40] sm:$0xff]
    %v157 = vld [vmem:[%s5 + $0x48] sm:$0xff]
    %v158 = vld [vmem:[%s5 + $0x50] sm:$0xff]
    %v159 = vld [vmem:[%s5 + $0x58] sm:$0xff]
    %v160 = vld [vmem:[%s5 + $0x60] sm:$0xff]
    %v161 = vld [vmem:[%s5 + $0x68] sm:$0xff]
    %v162 = vld [vmem:[%s5 + $0x70] sm:$0xff]
    %v163 = vld [vmem:[%s5 + $0x78] sm:$0xff]
    %v164 = vld [vmem:[%s6] sm:$0x1]
    %v165 = vld [vmem:[%s1] sm:$0x3]
    %s166 = scalar_lea.vmem %s1, 2
    %v167 = vld [vmem:[%s166] sm:$0x3]
    %s168 = scalar_lea.vmem %s1, 4
    %v169 = vld [vmem:[%s168] sm:$0x3]
    %s170 = scalar_lea.vmem %s1, 6
    %v171 = vld [vmem:[%s170] sm:$0x3]
    %v172 = vld [vmem:[%s0] sm:$0x3]
    %173 = vmatprep.subr.mxu0 0.0
    %174 = vmatpush1.msra.mxu0 %v29
    %175 = vmatprep.subr.mxu0 0.0
    %176 = vmatpush1.msra.mxu0 %v30
    %177 = vmatprep.subr.mxu0 0.0
    %178 = vmatpush1.msra.mxu0 %v31
    %179 = vmatprep.subr.mxu0 0.0
    %180 = vmatpush1.msra.mxu0 %v32
    %181 = vmatprep.subr.mxu0 0.0
    %182 = vmatpush1.msra.mxu0 %v33
    %183 = vmatprep.subr.mxu0 0.0
    %184 = vmatpush1.msra.mxu0 %v34
    %185 = vmatprep.subr.mxu0 0.0
    %186 = vmatpush1.msra.mxu0 %v35
    %187 = vmatprep.subr.mxu0 0.0
    %188 = vmatpush1.msra.mxu0 %v36
    %189 = vmatprep.subr.mxu0 0.0
    %190 = vmatpush1.msra.mxu0 %v37
    %191 = vmatprep.subr.mxu0 0.0
    %192 = vmatpush1.msra.mxu0 %v38
    %193 = vmatprep.subr.mxu0 0.0
    %194 = vmatpush1.msra.mxu0 %v39
    %195 = vmatprep.subr.mxu0 0.0
    %196 = vmatpush1.msra.mxu0 %v40
    %197 = vmatprep.subr.mxu0 0.0
    %198 = vmatpush1.msra.mxu0 %v41
    %199 = vmatprep.subr.mxu0 0.0
    %200 = vmatpush1.msra.mxu0 %v42
    %201 = vmatprep.subr.mxu0 0.0
    %202 = vmatpush1.msra.mxu0 %v43
    %203 = vmatprep.subr.mxu0 0.0
    %204 = vmatpush1.msra.mxu0 %v44
    %205 = vmatprep.subr.mxu0 0.0
    %206 = vmatpush1.msra.mxu0 0.0
    %207 = vmatprep.subr.mxu0 0.0
    %208 = vmatpush1.msra.mxu0 0.0
    %209 = vmatprep.subr.mxu0 0.0
    %210 = vmatpush1.msra.mxu0 0.0
    %211 = vmatprep.subr.mxu0 0.0
    %212 = vmatpush1.msra.mxu0 0.0
    %213 = vmatprep.subr.mxu0 0.0
    %214 = vmatpush1.msra.mxu0 0.0
    %215 = vmatprep.subr.mxu0 0.0
    %216 = vmatpush1.msra.mxu0 0.0
    %217 = vmatprep.subr.mxu0 0.0
    %218 = vmatpush1.msra.mxu0 0.0
    %219 = vmatprep.subr.mxu0 0.0
    %220 = vmatpush1.msra.mxu0 0.0
    %221 = vmatprep.subr.mxu0 0.0
    %222 = vmatpush1.msra.mxu0 0.0
    %223 = vmatprep.subr.mxu0 0.0
    %224 = vmatpush1.msra.mxu0 0.0
    %225 = vmatprep.subr.mxu0 0.0
    %226 = vmatpush1.msra.mxu0 0.0
    %227 = vmatprep.subr.mxu0 0.0
    %228 = vmatpush1.msra.mxu0 0.0
    %229 = vmatprep.subr.mxu0 0.0
    %230 = vmatpush1.msra.mxu0 0.0
    %231 = vmatprep.subr.mxu0 0.0
    %232 = vmatpush1.msra.mxu0 0.0
    %233 = vmatprep.subr.mxu0 0.0
    %234 = vmatpush1.msra.mxu0 0.0
    %235 = vmatprep.subr.mxu0 0.0
    %236 = vmatpush1.msra.mxu0 0.0
    %237 = vmatprep.mubr.f32.mxu0 0.0
    %238 = vmatmul.mubr.f32.gmra.mrb[0].mxu0 %v165
    %v239 = vpop.f32.mrb[0].mxu0
    %v240 = vadd.f32 %v172, %v239
    %v241 = vpop.f32.mrb[0].mxu0
    %242 = vdwg.mxu0
    %v243 = vtanh.pop %v240
    %v245 = vlaneseq
    %v246 = vshrl.u32 %v245, 7
    %v247 = vsub.s32 0, %v246
    %v248 = vrot.slane %v143, %v247
    %250 = vmatprep.subr.mxu0 0.0
    %251 = vmatpush1.msra.mxu0 %v45
    %252 = vmatprep.subr.mxu0 0.0
    %253 = vmatpush1.msra.mxu0 %v46
    %254 = vmatprep.subr.mxu0 0.0
    %255 = vmatpush1.msra.mxu0 %v47
    %256 = vmatprep.subr.mxu0 0.0
    %257 = vmatpush1.msra.mxu0 %v48
    %258 = vmatprep.subr.mxu0 0.0
    %259 = vmatpush1.msra.mxu0 %v49
    %260 = vmatprep.subr.mxu0 0.0
    %261 = vmatpush1.msra.mxu0 %v50
    %262 = vmatprep.subr.mxu0 0.0
    %263 = vmatpush1.msra.mxu0 %v51
    %264 = vmatprep.subr.mxu0 0.0
    %265 = vmatpush1.msra.mxu0 %v52
    %266 = vmatprep.subr.mxu0 0.0
    %267 = vmatpush1.msra.mxu0 %v53
    %268 = vmatprep.subr.mxu0 0.0
    %269 = vmatpush1.msra.mxu0 %v54
    %270 = vmatprep.subr.mxu0 0.0
    %271 = vmatpush1.msra.mxu0 %v55
    %272 = vmatprep.subr.mxu0 0.0
    %273 = vmatpush1.msra.mxu0 %v56
    %274 = vmatprep.subr.mxu0 0.0
    %275 = vmatpush1.msra.mxu0 %v57
    %276 = vmatprep.subr.mxu0 0.0
    %277 = vmatpush1.msra.mxu0 %v58
    %278 = vmatprep.subr.mxu0 0.0
    %279 = vmatpush1.msra.mxu0 %v59
    %280 = vmatprep.subr.mxu0 0.0
    %281 = vmatpush1.msra.mxu0 %v60
    %282 = vmatprep.subr.mxu0 0.0
    %283 = vmatpush1.msra.mxu0 %v61
    %284 = vmatprep.subr.mxu0 0.0
    %285 = vmatpush1.msra.mxu0 %v62
    %286 = vmatprep.subr.mxu0 0.0
    %287 = vmatpush1.msra.mxu0 %v63
    %288 = vmatprep.subr.mxu0 0.0
    %289 = vmatpush1.msra.mxu0 %v64
    %290 = vmatprep.subr.mxu0 0.0
    %291 = vmatpush1.msra.mxu0 %v65
    %292 = vmatprep.subr.mxu0 0.0
    %293 = vmatpush1.msra.mxu0 %v66
    %294 = vmatprep.subr.mxu0 0.0
    %295 = vmatpush1.msra.mxu0 %v67
    %296 = vmatprep.subr.mxu0 0.0
    %297 = vmatpush1.msra.mxu0 %v68
    %298 = vmatprep.subr.mxu0 0.0
    %299 = vmatpush1.msra.mxu0 %v69
    %300 = vmatprep.subr.mxu0 0.0
    %301 = vmatpush1.msra.mxu0 %v70
    %302 = vmatprep.subr.mxu0 0.0
    %303 = vmatpush1.msra.mxu0 %v71
    %304 = vmatprep.subr.mxu0 0.0
    %305 = vmatpush1.msra.mxu0 %v72
    %306 = vmatprep.subr.mxu0 0.0
    %307 = vmatpush1.msra.mxu0 %v73
    %308 = vmatprep.subr.mxu0 0.0
    %309 = vmatpush1.msra.mxu0 %v74
    %310 = vmatprep.subr.mxu0 0.0
    %311 = vmatpush1.msra.mxu0 %v75
    %312 = vmatprep.subr.mxu0 0.0
    %313 = vmatpush1.msra.mxu0 %v76
    %314 = vmatprep.mubr.f32.mxu0 %v167
    %315 = vmatmul.mubr.f32.gmra.mrb[0].mxu0 %v243
    %v316 = vpop.f32.mrb[0].mxu0
    %v317 = vadd.f32 %v248, %v316
    %v318 = vpop.f32.mrb[0].mxu0
    %319 = vdwg.mxu0
    %v320 = vtanh.pop %v317
    %v322 = vlaneseq
    %v323 = vshrl.u32 %v322, 7
    %v324 = vsub.s32 0, %v323
    %v325 = vrot.slane %v145, %v324
    %327 = vmatprep.subr.mxu0 0.0
    %328 = vmatpush1.msra.mxu0 %v78
    %329 = vmatprep.subr.mxu0 0.0
    %330 = vmatpush1.msra.mxu0 %v79
    %331 = vmatprep.subr.mxu0 0.0
    %332 = vmatpush1.msra.mxu0 %v80
    %333 = vmatprep.subr.mxu0 0.0
    %334 = vmatpush1.msra.mxu0 %v81
    %335 = vmatprep.subr.mxu0 0.0
    %336 = vmatpush1.msra.mxu0 %v82
    %337 = vmatprep.subr.mxu0 0.0
    %338 = vmatpush1.msra.mxu0 %v83
    %339 = vmatprep.subr.mxu0 0.0
    %340 = vmatpush1.msra.mxu0 %v84
    %341 = vmatprep.subr.mxu0 0.0
    %342 = vmatpush1.msra.mxu0 %v85
    %343 = vmatprep.subr.mxu0 0.0
    %344 = vmatpush1.msra.mxu0 %v86
    %345 = vmatprep.subr.mxu0 0.0
    %346 = vmatpush1.msra.mxu0 %v87
    %347 = vmatprep.subr.mxu0 0.0
    %348 = vmatpush1.msra.mxu0 %v88
    %349 = vmatprep.subr.mxu0 0.0
    %350 = vmatpush1.msra.mxu0 %v89
    %351 = vmatprep.subr.mxu0 0.0
    %352 = vmatpush1.msra.mxu0 %v90
    %353 = vmatprep.subr.mxu0 0.0
    %354 = vmatpush1.msra.mxu0 %v91
    %355 = vmatprep.subr.mxu0 0.0
    %356 = vmatpush1.msra.mxu0 %v92
    %357 = vmatprep.subr.mxu0 0.0
    %358 = vmatpush1.msra.mxu0 %v93
    %359 = vmatprep.subr.mxu0 0.0
    %360 = vmatpush1.msra.mxu0 %v94
    %361 = vmatprep.subr.mxu0 0.0
    %362 = vmatpush1.msra.mxu0 %v95
    %363 = vmatprep.subr.mxu0 0.0
    %364 = vmatpush1.msra.mxu0 %v96
    %365 = vmatprep.subr.mxu0 0.0
    %366 = vmatpush1.msra.mxu0 %v97
    %367 = vmatprep.subr.mxu0 0.0
    %368 = vmatpush1.msra.mxu0 %v98
    %369 = vmatprep.subr.mxu0 0.0
    %370 = vmatpush1.msra.mxu0 %v99
    %371 = vmatprep.subr.mxu0 0.0
    %372 = vmatpush1.msra.mxu0 %v100
    %373 = vmatprep.subr.mxu0 0.0
    %374 = vmatpush1.msra.mxu0 %v101
    %375 = vmatprep.subr.mxu0 0.0
    %376 = vmatpush1.msra.mxu0 %v102
    %377 = vmatprep.subr.mxu0 0.0
    %378 = vmatpush1.msra.mxu0 %v103
    %379 = vmatprep.subr.mxu0 0.0
    %380 = vmatpush1.msra.mxu0 %v104
    %381 = vmatprep.subr.mxu0 0.0
    %382 = vmatpush1.msra.mxu0 %v105
    %383 = vmatprep.subr.mxu0 0.0
    %384 = vmatpush1.msra.mxu0 %v106
    %385 = vmatprep.subr.mxu0 0.0
    %386 = vmatpush1.msra.mxu0 %v107
    %387 = vmatprep.subr.mxu0 0.0
    %388 = vmatpush1.msra.mxu0 %v108
    %389 = vmatprep.subr.mxu0 0.0
    %390 = vmatpush1.msra.mxu0 %v109
    %391 = vmatprep.mubr.f32.mxu0 %v169
    %392 = vmatmul.mubr.f32.gmra.mrb[0].mxu0 %v320
    %v393 = vpop.f32.mrb[0].mxu0
    %v394 = vadd.f32 %v325, %v393
    %v395 = vpop.f32.mrb[0].mxu0
    %396 = vdwg.mxu0
    %v397 = vtanh.pop %v394
    %v399 = vlaneseq
    %v400 = vshrl.u32 %v399, 7
    %v401 = vsub.s32 0, %v400
    %v402 = vrot.slane %v147, %v401
    %404 = vmatprep.subr.mxu0 0.0
    %405 = vmatpush1.msra.mxu0 %v111
    %406 = vmatprep.subr.mxu0 0.0
    %407 = vmatpush1.msra.mxu0 %v112
    %408 = vmatprep.subr.mxu0 0.0
    %409 = vmatpush1.msra.mxu0 %v113
    %410 = vmatprep.subr.mxu0 0.0
    %411 = vmatpush1.msra.mxu0 %v114
    %412 = vmatprep.subr.mxu0 0.0
    %413 = vmatpush1.msra.mxu0 %v115
    %414 = vmatprep.subr.mxu0 0.0
    %415 = vmatpush1.msra.mxu0 %v116
    %416 = vmatprep.subr.mxu0 0.0
    %417 = vmatpush1.msra.mxu0 %v117
    %418 = vmatprep.subr.mxu0 0.0
    %419 = vmatpush1.msra.mxu0 %v118
    %420 = vmatprep.subr.mxu0 0.0
    %421 = vmatpush1.msra.mxu0 %v119
    %422 = vmatprep.subr.mxu0 0.0
    %423 = vmatpush1.msra.mxu0 %v120
    %424 = vmatprep.subr.mxu0 0.0
    %425 = vmatpush1.msra.mxu0 %v121
    %426 = vmatprep.subr.mxu0 0.0
    %427 = vmatpush1.msra.mxu0 %v122
    %428 = vmatprep.subr.mxu0 0.0
    %429 = vmatpush1.msra.mxu0 %v123
    %430 = vmatprep.subr.mxu0 0.0
    %431 = vmatpush1.msra.mxu0 %v124
    %432 = vmatprep.subr.mxu0 0.0
    %433 = vmatpush1.msra.mxu0 %v125
    %434 = vmatprep.subr.mxu0 0.0
    %435 = vmatpush1.msra.mxu0 %v126
    %436 = vmatprep.subr.mxu0 0.0
    %437 = vmatpush1.msra.mxu0 %v127
    %438 = vmatprep.subr.mxu0 0.0
    %439 = vmatpush1.msra.mxu0 %v128
    %440 = vmatprep.subr.mxu0 0.0
    %441 = vmatpush1.msra.mxu0 %v129
    %442 = vmatprep.subr.mxu0 0.0
    %443 = vmatpush1.msra.mxu0 %v130
    %444 = vmatprep.subr.mxu0 0.0
    %445 = vmatpush1.msra.mxu0 %v131
    %446 = vmatprep.subr.mxu0 0.0
    %447 = vmatpush1.msra.mxu0 %v132
    %448 = vmatprep.subr.mxu0 0.0
    %449 = vmatpush1.msra.mxu0 %v133
    %450 = vmatprep.subr.mxu0 0.0
    %451 = vmatpush1.msra.mxu0 %v134
    %452 = vmatprep.subr.mxu0 0.0
    %453 = vmatpush1.msra.mxu0 %v135
    %454 = vmatprep.subr.mxu0 0.0
    %455 = vmatpush1.msra.mxu0 %v136
    %456 = vmatprep.subr.mxu0 0.0
    %457 = vmatpush1.msra.mxu0 %v137
    %458 = vmatprep.subr.mxu0 0.0
    %459 = vmatpush1.msra.mxu0 %v138
    %460 = vmatprep.subr.mxu0 0.0
    %461 = vmatpush1.msra.mxu0 %v139
    %462 = vmatprep.subr.mxu0 0.0
    %463 = vmatpush1.msra.mxu0 %v140
    %464 = vmatprep.subr.mxu0 0.0
    %465 = vmatpush1.msra.mxu0 %v141
    %466 = vmatprep.subr.mxu0 0.0
    %467 = vmatpush1.msra.mxu0 %v142
    %468 = vmatprep.mubr.f32.mxu0 %v171
    %469 = vmatmul.mubr.f32.gmra.mrb[0].mxu0 %v397
    %v470 = vpop.f32.mrb[0].mxu0
    %v471 = vadd.f32 %v402, %v470
    %v472 = vpop.f32.mrb[0].mxu0
    %473 = vdwg.mxu0
    %v474 = vtanh.pop %v471
    %s475 = scalar_lea.vmem %s0, 2
    %v476 = vld [vmem:[%s475] sm:$0x3]
    %477 = vmatprep.subr.mxu0 0.0
    %478 = vmatpush1.msra.mxu0 %v29
    %479 = vmatprep.subr.mxu0 0.0
    %480 = vmatpush1.msra.mxu0 %v30
    %481 = vmatprep.subr.mxu0 0.0
    %482 = vmatpush1.msra.mxu0 %v31
    %483 = vmatprep.subr.mxu0 0.0
    %484 = vmatpush1.msra.mxu0 %v32
    %485 = vmatprep.subr.mxu0 0.0
    %486 = vmatpush1.msra.mxu0 %v33
    %487 = vmatprep.subr.mxu0 0.0
    %488 = vmatpush1.msra.mxu0 %v34
    %489 = vmatprep.subr.mxu0 0.0
    %490 = vmatpush1.msra.mxu0 %v35
    %491 = vmatprep.subr.mxu0 0.0
    %492 = vmatpush1.msra.mxu0 %v36
    %493 = vmatprep.subr.mxu0 0.0
    %494 = vmatpush1.msra.mxu0 %v37
    %495 = vmatprep.subr.mxu0 0.0
    %496 = vmatpush1.msra.mxu0 %v38
    %497 = vmatprep.subr.mxu0 0.0
    %498 = vmatpush1.msra.mxu0 %v39
    %499 = vmatprep.subr.mxu0 0.0
    %500 = vmatpush1.msra.mxu0 %v40
    %501 = vmatprep.subr.mxu0 0.0
    %502 = vmatpush1.msra.mxu0 %v41
    %503 = vmatprep.subr.mxu0 0.0
    %504 = vmatpush1.msra.mxu0 %v42
    %505 = vmatprep.subr.mxu0 0.0
    %506 = vmatpush1.msra.mxu0 %v43
    %507 = vmatprep.subr.mxu0 0.0
    %508 = vmatpush1.msra.mxu0 %v44
    %509 = vmatprep.subr.mxu0 0.0
    %510 = vmatpush1.msra.mxu0 0.0
    %511 = vmatprep.subr.mxu0 0.0
    %512 = vmatpush1.msra.mxu0 0.0
    %513 = vmatprep.subr.mxu0 0.0
    %514 = vmatpush1.msra.mxu0 0.0
    %515 = vmatprep.subr.mxu0 0.0
    %516 = vmatpush1.msra.mxu0 0.0
    %517 = vmatprep.subr.mxu0 0.0
    %518 = vmatpush1.msra.mxu0 0.0
    %519 = vmatprep.subr.mxu0 0.0
    %520 = vmatpush1.msra.mxu0 0.0
    %521 = vmatprep.subr.mxu0 0.0
    %522 = vmatpush1.msra.mxu0 0.0
    %523 = vmatprep.subr.mxu0 0.0
    %524 = vmatpush1.msra.mxu0 0.0
    %525 = vmatprep.subr.mxu0 0.0
    %526 = vmatpush1.msra.mxu0 0.0
    %527 = vmatprep.subr.mxu0 0.0
    %528 = vmatpush1.msra.mxu0 0.0
    %529 = vmatprep.subr.mxu0 0.0
    %530 = vmatpush1.msra.mxu0 0.0
    %531 = vmatprep.subr.mxu0 0.0
    %532 = vmatpush1.msra.mxu0 0.0
    %533 = vmatprep.subr.mxu0 0.0
    %534 = vmatpush1.msra.mxu0 0.0
    %535 = vmatprep.subr.mxu0 0.0
    %536 = vmatpush1.msra.mxu0 0.0
    %537 = vmatprep.subr.mxu0 0.0
    %538 = vmatpush1.msra.mxu0 0.0
    %539 = vmatprep.subr.mxu0 0.0
    %540 = vmatpush1.msra.mxu0 0.0
    %541 = vmatprep.mubr.f32.mxu0 0.0
    %542 = vmatmul.mubr.f32.gmra.mrb[0].mxu0 %v243
    %v543 = vpop.f32.mrb[0].mxu0
    %v544 = vadd.f32 %v476, %v543
    %v545 = vpop.f32.mrb[0].mxu0
    %546 = vdwg.mxu0
    %v547 = vtanh.pop %v544
    %548 = vmatprep.subr.mxu0 0.0
    %549 = vmatpush1.msra.mxu0 %v45
    %550 = vmatprep.subr.mxu0 0.0
    %551 = vmatpush1.msra.mxu0 %v46
    %552 = vmatprep.subr.mxu0 0.0
    %553 = vmatpush1.msra.mxu0 %v47
    %554 = vmatprep.subr.mxu0 0.0
    %555 = vmatpush1.msra.mxu0 %v48
    %556 = vmatprep.subr.mxu0 0.0
    %557 = vmatpush1.msra.mxu0 %v49
    %558 = vmatprep.subr.mxu0 0.0
    %559 = vmatpush1.msra.mxu0 %v50
    %560 = vmatprep.subr.mxu0 0.0
    %561 = vmatpush1.msra.mxu0 %v51
    %562 = vmatprep.subr.mxu0 0.0
    %563 = vmatpush1.msra.mxu0 %v52
    %564 = vmatprep.subr.mxu0 0.0
    %565 = vmatpush1.msra.mxu0 %v53
    %566 = vmatprep.subr.mxu0 0.0
    %567 = vmatpush1.msra.mxu0 %v54
    %568 = vmatprep.subr.mxu0 0.0
    %569 = vmatpush1.msra.mxu0 %v55
    %570 = vmatprep.subr.mxu0 0.0
    %571 = vmatpush1.msra.mxu0 %v56
    %572 = vmatprep.subr.mxu0 0.0
    %573 = vmatpush1.msra.mxu0 %v57
    %574 = vmatprep.subr.mxu0 0.0
    %575 = vmatpush1.msra.mxu0 %v58
    %576 = vmatprep.subr.mxu0 0.0
    %577 = vmatpush1.msra.mxu0 %v59
    %578 = vmatprep.subr.mxu0 0.0
    %579 = vmatpush1.msra.mxu0 %v60
    %580 = vmatprep.subr.mxu0 0.0
    %581 = vmatpush1.msra.mxu0 %v61
    %582 = vmatprep.subr.mxu0 0.0
    %583 = vmatpush1.msra.mxu0 %v62
    %584 = vmatprep.subr.mxu0 0.0
    %585 = vmatpush1.msra.mxu0 %v63
    %586 = vmatprep.subr.mxu0 0.0
    %587 = vmatpush1.msra.mxu0 %v64
    %588 = vmatprep.subr.mxu0 0.0
    %589 = vmatpush1.msra.mxu0 %v65
    %590 = vmatprep.subr.mxu0 0.0
    %591 = vmatpush1.msra.mxu0 %v66
    %592 = vmatprep.subr.mxu0 0.0
    %593 = vmatpush1.msra.mxu0 %v67
    %594 = vmatprep.subr.mxu0 0.0
    %595 = vmatpush1.msra.mxu0 %v68
    %596 = vmatprep.subr.mxu0 0.0
    %597 = vmatpush1.msra.mxu0 %v69
    %598 = vmatprep.subr.mxu0 0.0
    %599 = vmatpush1.msra.mxu0 %v70
    %600 = vmatprep.subr.mxu0 0.0
    %601 = vmatpush1.msra.mxu0 %v71
    %602 = vmatprep.subr.mxu0 0.0
    %603 = vmatpush1.msra.mxu0 %v72
    %604 = vmatprep.subr.mxu0 0.0
    %605 = vmatpush1.msra.mxu0 %v73
    %606 = vmatprep.subr.mxu0 0.0
    %607 = vmatpush1.msra.mxu0 %v74
    %608 = vmatprep.subr.mxu0 0.0
    %609 = vmatpush1.msra.mxu0 %v75
    %610 = vmatprep.subr.mxu0 0.0
    %611 = vmatpush1.msra.mxu0 %v76
    %612 = vmatprep.mubr.f32.mxu0 %v320
    %613 = vmatmul.mubr.f32.gmra.mrb[0].mxu0 %v547
    %v614 = vpop.f32.mrb[0].mxu0
    %v615 = vadd.f32 %v248, %v614
    %v616 = vpop.f32.mrb[0].mxu0
    %617 = vdwg.mxu0
    %v618 = vtanh.pop %v615
    %619 = vmatprep.subr.mxu0 0.0
    %620 = vmatpush1.msra.mxu0 %v78
    %621 = vmatprep.subr.mxu0 0.0
    %622 = vmatpush1.msra.mxu0 %v79
    %623 = vmatprep.subr.mxu0 0.0
    %624 = vmatpush1.msra.mxu0 %v80
    %625 = vmatprep.subr.mxu0 0.0
    %626 = vmatpush1.msra.mxu0 %v81
    %627 = vmatprep.subr.mxu0 0.0
    %628 = vmatpush1.msra.mxu0 %v82
    %629 = vmatprep.subr.mxu0 0.0
    %630 = vmatpush1.msra.mxu0 %v83
    %631 = vmatprep.subr.mxu0 0.0
    %632 = vmatpush1.msra.mxu0 %v84
    %633 = vmatprep.subr.mxu0 0.0
    %634 = vmatpush1.msra.mxu0 %v85
    %635 = vmatprep.subr.mxu0 0.0
    %636 = vmatpush1.msra.mxu0 %v86
    %637 = vmatprep.subr.mxu0 0.0
    %638 = vmatpush1.msra.mxu0 %v87
    %639 = vmatprep.subr.mxu0 0.0
    %640 = vmatpush1.msra.mxu0 %v88
    %641 = vmatprep.subr.mxu0 0.0
    %642 = vmatpush1.msra.mxu0 %v89
    %643 = vmatprep.subr.mxu0 0.0
    %644 = vmatpush1.msra.mxu0 %v90
    %645 = vmatprep.subr.mxu0 0.0
    %646 = vmatpush1.msra.mxu0 %v91
    %647 = vmatprep.subr.mxu0 0.0
    %648 = vmatpush1.msra.mxu0 %v92
    %649 = vmatprep.subr.mxu0 0.0
    %650 = vmatpush1.msra.mxu0 %v93
    %651 = vmatprep.subr.mxu0 0.0
    %652 = vmatpush1.msra.mxu0 %v94
    %653 = vmatprep.subr.mxu0 0.0
    %654 = vmatpush1.msra.mxu0 %v95
    %655 = vmatprep.subr.mxu0 0.0
    %656 = vmatpush1.msra.mxu0 %v96
    %657 = vmatprep.subr.mxu0 0.0
    %658 = vmatpush1.msra.mxu0 %v97
    %659 = vmatprep.subr.mxu0 0.0
    %660 = vmatpush1.msra.mxu0 %v98
    %661 = vmatprep.subr.mxu0 0.0
    %662 = vmatpush1.msra.mxu0 %v99
    %663 = vmatprep.subr.mxu0 0.0
    %664 = vmatpush1.msra.mxu0 %v100
    %665 = vmatprep.subr.mxu0 0.0
    %666 = vmatpush1.msra.mxu0 %v101
    %667 = vmatprep.subr.mxu0 0.0
    %668 = vmatpush1.msra.mxu0 %v102
    %669 = vmatprep.subr.mxu0 0.0
    %670 = vmatpush1.msra.mxu0 %v103
    %671 = vmatprep.subr.mxu0 0.0
    %672 = vmatpush1.msra.mxu0 %v104
    %673 = vmatprep.subr.mxu0 0.0
    %674 = vmatpush1.msra.mxu0 %v105
    %675 = vmatprep.subr.mxu0 0.0
    %676 = vmatpush1.msra.mxu0 %v106
    %677 = vmatprep.subr.mxu0 0.0
    %678 = vmatpush1.msra.mxu0 %v107
    %679 = vmatprep.subr.mxu0 0.0
    %680 = vmatpush1.msra.mxu0 %v108
    %681 = vmatprep.subr.mxu0 0.0
    %682 = vmatpush1.msra.mxu0 %v109
    %683 = vmatprep.mubr.f32.mxu0 %v397
    %684 = vmatmul.mubr.f32.gmra.mrb[0].mxu0 %v618
    %v685 = vpop.f32.mrb[0].mxu0
    %v686 = vadd.f32 %v325, %v685
    %v687 = vpop.f32.mrb[0].mxu0
    %688 = vdwg.mxu0
    %v689 = vtanh.pop %v686
    %690 = vmatprep.subr.mxu0 0.0
    %691 = vmatpush1.msra.mxu0 %v111
    %692 = vmatprep.subr.mxu0 0.0
    %693 = vmatpush1.msra.mxu0 %v112
    %694 = vmatprep.subr.mxu0 0.0
    %695 = vmatpush1.msra.mxu0 %v113
    %696 = vmatprep.subr.mxu0 0.0
    %697 = vmatpush1.msra.mxu0 %v114
    %698 = vmatprep.subr.mxu0 0.0
    %699 = vmatpush1.msra.mxu0 %v115
    %700 = vmatprep.subr.mxu0 0.0
    %701 = vmatpush1.msra.mxu0 %v116
    %702 = vmatprep.subr.mxu0 0.0
    %703 = vmatpush1.msra.mxu0 %v117
    %704 = vmatprep.subr.mxu0 0.0
    %705 = vmatpush1.msra.mxu0 %v118
    %706 = vmatprep.subr.mxu0 0.0
    %707 = vmatpush1.msra.mxu0 %v119
    %708 = vmatprep.subr.mxu0 0.0
    %709 = vmatpush1.msra.mxu0 %v120
    %710 = vmatprep.subr.mxu0 0.0
    %711 = vmatpush1.msra.mxu0 %v121
    %712 = vmatprep.subr.mxu0 0.0
    %713 = vmatpush1.msra.mxu0 %v122
    %714 = vmatprep.subr.mxu0 0.0
    %715 = vmatpush1.msra.mxu0 %v123
    %716 = vmatprep.subr.mxu0 0.0
    %717 = vmatpush1.msra.mxu0 %v124
    %718 = vmatprep.subr.mxu0 0.0
    %719 = vmatpush1.msra.mxu0 %v125
    %720 = vmatprep.subr.mxu0 0.0
    %721 = vmatpush1.msra.mxu0 %v126
    %722 = vmatprep.subr.mxu0 0.0
    %723 = vmatpush1.msra.mxu0 %v127
    %724 = vmatprep.subr.mxu0 0.0
    %725 = vmatpush1.msra.mxu0 %v128
    %726 = vmatprep.subr.mxu0 0.0
    %727 = vmatpush1.msra.mxu0 %v129
    %728 = vmatprep.subr.mxu0 0.0
    %729 = vmatpush1.msra.mxu0 %v130
    %730 = vmatprep.subr.mxu0 0.0
    %731 = vmatpush1.msra.mxu0 %v131
    %732 = vmatprep.subr.mxu0 0.0
    %733 = vmatpush1.msra.mxu0 %v132
    %734 = vmatprep.subr.mxu0 0.0
    %735 = vmatpush1.msra.mxu0 %v133
    %736 = vmatprep.subr.mxu0 0.0
    %737 = vmatpush1.msra.mxu0 %v134
    %738 = vmatprep.subr.mxu0 0.0
    %739 = vmatpush1.msra.mxu0 %v135
    %740 = vmatprep.subr.mxu0 0.0
    %741 = vmatpush1.msra.mxu0 %v136
    %742 = vmatprep.subr.mxu0 0.0
    %743 = vmatpush1.msra.mxu0 %v137
    %744 = vmatprep.subr.mxu0 0.0
    %745 = vmatpush1.msra.mxu0 %v138
    %746 = vmatprep.subr.mxu0 0.0
    %747 = vmatpush1.msra.mxu0 %v139
    %748 = vmatprep.subr.mxu0 0.0
    %749 = vmatpush1.msra.mxu0 %v140
    %750 = vmatprep.subr.mxu0 0.0
    %751 = vmatpush1.msra.mxu0 %v141
    %752 = vmatprep.subr.mxu0 0.0
    %753 = vmatpush1.msra.mxu0 %v142
    %754 = vmatprep.mubr.f32.mxu0 %v474
    %755 = vmatmul.mubr.f32.gmra.mrb[0].mxu0 %v689
    %v756 = vpop.f32.mrb[0].mxu0
    %v757 = vadd.f32 %v402, %v756
    %v758 = vpop.f32.mrb[0].mxu0
    %759 = vdwg.mxu0
    %v760 = vtanh.pop %v757
    %s761 = scalar_lea.vmem %s0, 4
    %v762 = vld [vmem:[%s761] sm:$0x3]
    %763 = vmatprep.subr.mxu0 0.0
    %764 = vmatpush1.msra.mxu0 %v29
    %765 = vmatprep.subr.mxu0 0.0
    %766 = vmatpush1.msra.mxu0 %v30
    %767 = vmatprep.subr.mxu0 0.0
    %768 = vmatpush1.msra.mxu0 %v31
    %769 = vmatprep.subr.mxu0 0.0
    %770 = vmatpush1.msra.mxu0 %v32
    %771 = vmatprep.subr.mxu0 0.0
    %772 = vmatpush1.msra.mxu0 %v33
    %773 = vmatprep.subr.mxu0 0.0
    %774 = vmatpush1.msra.mxu0 %v34
    %775 = vmatprep.subr.mxu0 0.0
    %776 = vmatpush1.msra.mxu0 %v35
    %777 = vmatprep.subr.mxu0 0.0
    %778 = vmatpush1.msra.mxu0 %v36
    %779 = vmatprep.subr.mxu0 0.0
    %780 = vmatpush1.msra.mxu0 %v37
    %781 = vmatprep.subr.mxu0 0.0
    %782 = vmatpush1.msra.mxu0 %v38
    %783 = vmatprep.subr.mxu0 0.0
    %784 = vmatpush1.msra.mxu0 %v39
    %785 = vmatprep.subr.mxu0 0.0
    %786 = vmatpush1.msra.mxu0 %v40
    %787 = vmatprep.subr.mxu0 0.0
    %788 = vmatpush1.msra.mxu0 %v41
    %789 = vmatprep.subr.mxu0 0.0
    %790 = vmatpush1.msra.mxu0 %v42
    %791 = vmatprep.subr.mxu0 0.0
    %792 = vmatpush1.msra.mxu0 %v43
    %793 = vmatprep.subr.mxu0 0.0
    %794 = vmatpush1.msra.mxu0 %v44
    %795 = vmatprep.subr.mxu0 0.0
    %796 = vmatpush1.msra.mxu0 0.0
    %797 = vmatprep.subr.mxu0 0.0
    %798 = vmatpush1.msra.mxu0 0.0
    %799 = vmatprep.subr.mxu0 0.0
    %800 = vmatpush1.msra.mxu0 0.0
    %801 = vmatprep.subr.mxu0 0.0
    %802 = vmatpush1.msra.mxu0 0.0
    %803 = vmatprep.subr.mxu0 0.0
    %804 = vmatpush1.msra.mxu0 0.0
    %805 = vmatprep.subr.mxu0 0.0
    %806 = vmatpush1.msra.mxu0 0.0
    %807 = vmatprep.subr.mxu0 0.0
    %808 = vmatpush1.msra.mxu0 0.0
    %809 = vmatprep.subr.mxu0 0.0
    %810 = vmatpush1.msra.mxu0 0.0
    %811 = vmatprep.subr.mxu0 0.0
    %812 = vmatpush1.msra.mxu0 0.0
    %813 = vmatprep.subr.mxu0 0.0
    %814 = vmatpush1.msra.mxu0 0.0
    %815 = vmatprep.subr.mxu0 0.0
    %816 = vmatpush1.msra.mxu0 0.0
    %817 = vmatprep.subr.mxu0 0.0
    %818 = vmatpush1.msra.mxu0 0.0
    %819 = vmatprep.subr.mxu0 0.0
    %820 = vmatpush1.msra.mxu0 0.0
    %821 = vmatprep.subr.mxu0 0.0
    %822 = vmatpush1.msra.mxu0 0.0
    %823 = vmatprep.subr.mxu0 0.0
    %824 = vmatpush1.msra.mxu0 0.0
    %825 = vmatprep.subr.mxu0 0.0
    %826 = vmatpush1.msra.mxu0 0.0
    %827 = vmatprep.mubr.f32.mxu0 0.0
    %828 = vmatmul.mubr.f32.gmra.mrb[0].mxu0 %v547
    %v829 = vpop.f32.mrb[0].mxu0
    %v830 = vadd.f32 %v762, %v829
    %v831 = vpop.f32.mrb[0].mxu0
    %832 = vdwg.mxu0
    %v833 = vtanh.pop %v830
    %834 = vmatprep.subr.mxu0 0.0
    %835 = vmatpush1.msra.mxu0 %v45
    %836 = vmatprep.subr.mxu0 0.0
    %837 = vmatpush1.msra.mxu0 %v46
    %838 = vmatprep.subr.mxu0 0.0
    %839 = vmatpush1.msra.mxu0 %v47
    %840 = vmatprep.subr.mxu0 0.0
    %841 = vmatpush1.msra.mxu0 %v48
    %842 = vmatprep.subr.mxu0 0.0
    %843 = vmatpush1.msra.mxu0 %v49
    %844 = vmatprep.subr.mxu0 0.0
    %845 = vmatpush1.msra.mxu0 %v50
    %846 = vmatprep.subr.mxu0 0.0
    %847 = vmatpush1.msra.mxu0 %v51
    %848 = vmatprep.subr.mxu0 0.0
    %849 = vmatpush1.msra.mxu0 %v52
    %850 = vmatprep.subr.mxu0 0.0
    %851 = vmatpush1.msra.mxu0 %v53
    %852 = vmatprep.subr.mxu0 0.0
    %853 = vmatpush1.msra.mxu0 %v54
    %854 = vmatprep.subr.mxu0 0.0
    %855 = vmatpush1.msra.mxu0 %v55
    %856 = vmatprep.subr.mxu0 0.0
    %857 = vmatpush1.msra.mxu0 %v56
    %858 = vmatprep.subr.mxu0 0.0
    %859 = vmatpush1.msra.mxu0 %v57
    %860 = vmatprep.subr.mxu0 0.0
    %861 = vmatpush1.msra.mxu0 %v58
    %862 = vmatprep.subr.mxu0 0.0
    %863 = vmatpush1.msra.mxu0 %v59
    %864 = vmatprep.subr.mxu0 0.0
    %865 = vmatpush1.msra.mxu0 %v60
    %866 = vmatprep.subr.mxu0 0.0
    %867 = vmatpush1.msra.mxu0 %v61
    %868 = vmatprep.subr.mxu0 0.0
    %869 = vmatpush1.msra.mxu0 %v62
    %870 = vmatprep.subr.mxu0 0.0
    %871 = vmatpush1.msra.mxu0 %v63
    %872 = vmatprep.subr.mxu0 0.0
    %873 = vmatpush1.msra.mxu0 %v64
    %874 = vmatprep.subr.mxu0 0.0
    %875 = vmatpush1.msra.mxu0 %v65
    %876 = vmatprep.subr.mxu0 0.0
    %877 = vmatpush1.msra.mxu0 %v66
    %878 = vmatprep.subr.mxu0 0.0
    %879 = vmatpush1.msra.mxu0 %v67
    %880 = vmatprep.subr.mxu0 0.0
    %881 = vmatpush1.msra.mxu0 %v68
    %882 = vmatprep.subr.mxu0 0.0
    %883 = vmatpush1.msra.mxu0 %v69
    %884 = vmatprep.subr.mxu0 0.0
    %885 = vmatpush1.msra.mxu0 %v70
    %886 = vmatprep.subr.mxu0 0.0
    %887 = vmatpush1.msra.mxu0 %v71
    %888 = vmatprep.subr.mxu0 0.0
    %889 = vmatpush1.msra.mxu0 %v72
    %890 = vmatprep.subr.mxu0 0.0
    %891 = vmatpush1.msra.mxu0 %v73
    %892 = vmatprep.subr.mxu0 0.0
    %893 = vmatpush1.msra.mxu0 %v74
    %894 = vmatprep.subr.mxu0 0.0
    %895 = vmatpush1.msra.mxu0 %v75
    %896 = vmatprep.subr.mxu0 0.0
    %897 = vmatpush1.msra.mxu0 %v76
    %898 = vmatprep.mubr.f32.mxu0 %v618
    %899 = vmatmul.mubr.f32.gmra.mrb[0].mxu0 %v833
    %v900 = vpop.f32.mrb[0].mxu0
    %v901 = vadd.f32 %v248, %v900
    %v902 = vpop.f32.mrb[0].mxu0
    %903 = vdwg.mxu0
    %v904 = vtanh.pop %v901
    %905 = vmatprep.subr.mxu0 0.0
    %906 = vmatpush1.msra.mxu0 %v78
    %907 = vmatprep.subr.mxu0 0.0
    %908 = vmatpush1.msra.mxu0 %v79
    %909 = vmatprep.subr.mxu0 0.0
    %910 = vmatpush1.msra.mxu0 %v80
    %911 = vmatprep.subr.mxu0 0.0
    %912 = vmatpush1.msra.mxu0 %v81
    %913 = vmatprep.subr.mxu0 0.0
    %914 = vmatpush1.msra.mxu0 %v82
    %915 = vmatprep.subr.mxu0 0.0
    %916 = vmatpush1.msra.mxu0 %v83
    %917 = vmatprep.subr.mxu0 0.0
    %918 = vmatpush1.msra.mxu0 %v84
    %919 = vmatprep.subr.mxu0 0.0
    %920 = vmatpush1.msra.mxu0 %v85
    %921 = vmatprep.subr.mxu0 0.0
    %922 = vmatpush1.msra.mxu0 %v86
    %923 = vmatprep.subr.mxu0 0.0
    %924 = vmatpush1.msra.mxu0 %v87
    %925 = vmatprep.subr.mxu0 0.0
    %926 = vmatpush1.msra.mxu0 %v88
    %927 = vmatprep.subr.mxu0 0.0
    %928 = vmatpush1.msra.mxu0 %v89
    %929 = vmatprep.subr.mxu0 0.0
    %930 = vmatpush1.msra.mxu0 %v90
    %931 = vmatprep.subr.mxu0 0.0
    %932 = vmatpush1.msra.mxu0 %v91
    %933 = vmatprep.subr.mxu0 0.0
    %934 = vmatpush1.msra.mxu0 %v92
    %935 = vmatprep.subr.mxu0 0.0
    %936 = vmatpush1.msra.mxu0 %v93
    %937 = vmatprep.subr.mxu0 0.0
    %938 = vmatpush1.msra.mxu0 %v94
    %939 = vmatprep.subr.mxu0 0.0
    %940 = vmatpush1.msra.mxu0 %v95
    %941 = vmatprep.subr.mxu0 0.0
    %942 = vmatpush1.msra.mxu0 %v96
    %943 = vmatprep.subr.mxu0 0.0
    %944 = vmatpush1.msra.mxu0 %v97
    %945 = vmatprep.subr.mxu0 0.0
    %946 = vmatpush1.msra.mxu0 %v98
    %947 = vmatprep.subr.mxu0 0.0
    %948 = vmatpush1.msra.mxu0 %v99
    %949 = vmatprep.subr.mxu0 0.0
    %950 = vmatpush1.msra.mxu0 %v100
    %951 = vmatprep.subr.mxu0 0.0
    %952 = vmatpush1.msra.mxu0 %v101
    %953 = vmatprep.subr.mxu0 0.0
    %954 = vmatpush1.msra.mxu0 %v102
    %955 = vmatprep.subr.mxu0 0.0
    %956 = vmatpush1.msra.mxu0 %v103
    %957 = vmatprep.subr.mxu0 0.0
    %958 = vmatpush1.msra.mxu0 %v104
    %959 = vmatprep.subr.mxu0 0.0
    %960 = vmatpush1.msra.mxu0 %v105
    %961 = vmatprep.subr.mxu0 0.0
    %962 = vmatpush1.msra.mxu0 %v106
    %963 = vmatprep.subr.mxu0 0.0
    %964 = vmatpush1.msra.mxu0 %v107
    %965 = vmatprep.subr.mxu0 0.0
    %966 = vmatpush1.msra.mxu0 %v108
    %967 = vmatprep.subr.mxu0 0.0
    %968 = vmatpush1.msra.mxu0 %v109
    %969 = vmatprep.mubr.f32.mxu0 %v689
    %970 = vmatmul.mubr.f32.gmra.mrb[0].mxu0 %v904
    %v971 = vpop.f32.mrb[0].mxu0
    %v972 = vadd.f32 %v325, %v971
    %v973 = vpop.f32.mrb[0].mxu0
    %974 = vdwg.mxu0
    %v975 = vtanh.pop %v972
    %976 = vmatprep.subr.mxu0 0.0
    %977 = vmatpush1.msra.mxu0 %v111
    %978 = vmatprep.subr.mxu0 0.0
    %979 = vmatpush1.msra.mxu0 %v112
    %980 = vmatprep.subr.mxu0 0.0
    %981 = vmatpush1.msra.mxu0 %v113
    %982 = vmatprep.subr.mxu0 0.0
    %983 = vmatpush1.msra.mxu0 %v114
    %984 = vmatprep.subr.mxu0 0.0
    %985 = vmatpush1.msra.mxu0 %v115
    %986 = vmatprep.subr.mxu0 0.0
    %987 = vmatpush1.msra.mxu0 %v116
    %988 = vmatprep.subr.mxu0 0.0
    %989 = vmatpush1.msra.mxu0 %v117
    %990 = vmatprep.subr.mxu0 0.0
    %991 = vmatpush1.msra.mxu0 %v118
    %992 = vmatprep.subr.mxu0 0.0
    %993 = vmatpush1.msra.mxu0 %v119
    %994 = vmatprep.subr.mxu0 0.0
    %995 = vmatpush1.msra.mxu0 %v120
    %996 = vmatprep.subr.mxu0 0.0
    %997 = vmatpush1.msra.mxu0 %v121
    %998 = vmatprep.subr.mxu0 0.0
    %999 = vmatpush1.msra.mxu0 %v122
    %1000 = vmatprep.subr.mxu0 0.0
    %1001 = vmatpush1.msra.mxu0 %v123
    %1002 = vmatprep.subr.mxu0 0.0
    %1003 = vmatpush1.msra.mxu0 %v124
    %1004 = vmatprep.subr.mxu0 0.0
    %1005 = vmatpush1.msra.mxu0 %v125
    %1006 = vmatprep.subr.mxu0 0.0
    %1007 = vmatpush1.msra.mxu0 %v126
    %1008 = vmatprep.subr.mxu0 0.0
    %1009 = vmatpush1.msra.mxu0 %v127
    %1010 = vmatprep.subr.mxu0 0.0
    %1011 = vmatpush1.msra.mxu0 %v128
    %1012 = vmatprep.subr.mxu0 0.0
    %1013 = vmatpush1.msra.mxu0 %v129
    %1014 = vmatprep.subr.mxu0 0.0
    %1015 = vmatpush1.msra.mxu0 %v130
    %1016 = vmatprep.subr.mxu0 0.0
    %1017 = vmatpush1.msra.mxu0 %v131
    %1018 = vmatprep.subr.mxu0 0.0
    %1019 = vmatpush1.msra.mxu0 %v132
    %1020 = vmatprep.subr.mxu0 0.0
    %1021 = vmatpush1.msra.mxu0 %v133
    %1022 = vmatprep.subr.mxu0 0.0
    %1023 = vmatpush1.msra.mxu0 %v134
    %1024 = vmatprep.subr.mxu0 0.0
    %1025 = vmatpush1.msra.mxu0 %v135
    %1026 = vmatprep.subr.mxu0 0.0
    %1027 = vmatpush1.msra.mxu0 %v136
    %1028 = vmatprep.subr.mxu0 0.0
    %1029 = vmatpush1.msra.mxu0 %v137
    %1030 = vmatprep.subr.mxu0 0.0
    %1031 = vmatpush1.msra.mxu0 %v138
    %1032 = vmatprep.subr.mxu0 0.0
    %1033 = vmatpush1.msra.mxu0 %v139
    %1034 = vmatprep.subr.mxu0 0.0
    %1035 = vmatpush1.msra.mxu0 %v140
    %1036 = vmatprep.subr.mxu0 0.0
    %1037 = vmatpush1.msra.mxu0 %v141
    %1038 = vmatprep.subr.mxu0 0.0
    %1039 = vmatpush1.msra.mxu0 %v142
    %1040 = vmatprep.mubr.f32.mxu0 %v760
    %1041 = vmatmul.mubr.f32.gmra.mrb[0].mxu0 %v975
    %v1042 = vpop.f32.mrb[0].mxu0
    %v1043 = vadd.f32 %v402, %v1042
    %v1044 = vpop.f32.mrb[0].mxu0
    %1045 = vdwg.mxu0
    %v1046 = vtanh.pop %v1043
    %s1047 = scalar_lea.vmem %s0, 6
    %v1048 = vld [vmem:[%s1047] sm:$0x3]
    %1049 = vmatprep.subr.mxu0 0.0
    %1050 = vmatpush1.msra.mxu0 %v29
    %1051 = vmatprep.subr.mxu0 0.0
    %1052 = vmatpush1.msra.mxu0 %v30
    %1053 = vmatprep.subr.mxu0 0.0
    %1054 = vmatpush1.msra.mxu0 %v31
    %1055 = vmatprep.subr.mxu0 0.0
    %1056 = vmatpush1.msra.mxu0 %v32
    %1057 = vmatprep.subr.mxu0 0.0
    %1058 = vmatpush1.msra.mxu0 %v33
    %1059 = vmatprep.subr.mxu0 0.0
    %1060 = vmatpush1.msra.mxu0 %v34
    %1061 = vmatprep.subr.mxu0 0.0
    %1062 = vmatpush1.msra.mxu0 %v35
    %1063 = vmatprep.subr.mxu0 0.0
    %1064 = vmatpush1.msra.mxu0 %v36
    %1065 = vmatprep.subr.mxu0 0.0
    %1066 = vmatpush1.msra.mxu0 %v37
    %1067 = vmatprep.subr.mxu0 0.0
    %1068 = vmatpush1.msra.mxu0 %v38
    %1069 = vmatprep.subr.mxu0 0.0
    %1070 = vmatpush1.msra.mxu0 %v39
    %1071 = vmatprep.subr.mxu0 0.0
    %1072 = vmatpush1.msra.mxu0 %v40
    %1073 = vmatprep.subr.mxu0 0.0
    %1074 = vmatpush1.msra.mxu0 %v41
    %1075 = vmatprep.subr.mxu0 0.0
    %1076 = vmatpush1.msra.mxu0 %v42
    %1077 = vmatprep.subr.mxu0 0.0
    %1078 = vmatpush1.msra.mxu0 %v43
    %1079 = vmatprep.subr.mxu0 0.0
    %1080 = vmatpush1.msra.mxu0 %v44
    %1081 = vmatprep.subr.mxu0 0.0
    %1082 = vmatpush1.msra.mxu0 0.0
    %1083 = vmatprep.subr.mxu0 0.0
    %1084 = vmatpush1.msra.mxu0 0.0
    %1085 = vmatprep.subr.mxu0 0.0
    %1086 = vmatpush1.msra.mxu0 0.0
    %1087 = vmatprep.subr.mxu0 0.0
    %1088 = vmatpush1.msra.mxu0 0.0
    %1089 = vmatprep.subr.mxu0 0.0
    %1090 = vmatpush1.msra.mxu0 0.0
    %1091 = vmatprep.subr.mxu0 0.0
    %1092 = vmatpush1.msra.mxu0 0.0
    %1093 = vmatprep.subr.mxu0 0.0
    %1094 = vmatpush1.msra.mxu0 0.0
    %1095 = vmatprep.subr.mxu0 0.0
    %1096 = vmatpush1.msra.mxu0 0.0
    %1097 = vmatprep.subr.mxu0 0.0
    %1098 = vmatpush1.msra.mxu0 0.0
    %1099 = vmatprep.subr.mxu0 0.0
    %1100 = vmatpush1.msra.mxu0 0.0
    %1101 = vmatprep.subr.mxu0 0.0
    %1102 = vmatpush1.msra.mxu0 0.0
    %1103 = vmatprep.subr.mxu0 0.0
    %1104 = vmatpush1.msra.mxu0 0.0
    %1105 = vmatprep.subr.mxu0 0.0
    %1106 = vmatpush1.msra.mxu0 0.0
    %1107 = vmatprep.subr.mxu0 0.0
    %1108 = vmatpush1.msra.mxu0 0.0
    %1109 = vmatprep.subr.mxu0 0.0
    %1110 = vmatpush1.msra.mxu0 0.0
    %1111 = vmatprep.subr.mxu0 0.0
    %1112 = vmatpush1.msra.mxu0 0.0
    %1113 = vmatprep.mubr.f32.mxu0 0.0
    %1114 = vmatmul.mubr.f32.gmra.mrb[0].mxu0 %v833
    %v1115 = vpop.f32.mrb[0].mxu0
    %v1116 = vadd.f32 %v1048, %v1115
    %v1117 = vpop.f32.mrb[0].mxu0
    %1118 = vdwg.mxu0
    %v1119 = vtanh.pop %v1116
    %1120 = vmatprep.subr.mxu0 0.0
    %1121 = vmatpush1.msra.mxu0 %v45
    %1122 = vmatprep.subr.mxu0 0.0
    %1123 = vmatpush1.msra.mxu0 %v46
    %1124 = vmatprep.subr.mxu0 0.0
    %1125 = vmatpush1.msra.mxu0 %v47
    %1126 = vmatprep.subr.mxu0 0.0
    %1127 = vmatpush1.msra.mxu0 %v48
    %1128 = vmatprep.subr.mxu0 0.0
    %1129 = vmatpush1.msra.mxu0 %v49
    %1130 = vmatprep.subr.mxu0 0.0
    %1131 = vmatpush1.msra.mxu0 %v50
    %1132 = vmatprep.subr.mxu0 0.0
    %1133 = vmatpush1.msra.mxu0 %v51
    %1134 = vmatprep.subr.mxu0 0.0
    %1135 = vmatpush1.msra.mxu0 %v52
    %1136 = vmatprep.subr.mxu0 0.0
    %1137 = vmatpush1.msra.mxu0 %v53
    %1138 = vmatprep.subr.mxu0 0.0
    %1139 = vmatpush1.msra.mxu0 %v54
    %1140 = vmatprep.subr.mxu0 0.0
    %1141 = vmatpush1.msra.mxu0 %v55
    %1142 = vmatprep.subr.mxu0 0.0
    %1143 = vmatpush1.msra.mxu0 %v56
    %1144 = vmatprep.subr.mxu0 0.0
    %1145 = vmatpush1.msra.mxu0 %v57
    %1146 = vmatprep.subr.mxu0 0.0
    %1147 = vmatpush1.msra.mxu0 %v58
    %1148 = vmatprep.subr.mxu0 0.0
    %1149 = vmatpush1.msra.mxu0 %v59
    %1150 = vmatprep.subr.mxu0 0.0
    %1151 = vmatpush1.msra.mxu0 %v60
    %1152 = vmatprep.subr.mxu0 0.0
    %1153 = vmatpush1.msra.mxu0 %v61
    %1154 = vmatprep.subr.mxu0 0.0
    %1155 = vmatpush1.msra.mxu0 %v62
    %1156 = vmatprep.subr.mxu0 0.0
    %1157 = vmatpush1.msra.mxu0 %v63
    %1158 = vmatprep.subr.mxu0 0.0
    %1159 = vmatpush1.msra.mxu0 %v64
    %1160 = vmatprep.subr.mxu0 0.0
    %1161 = vmatpush1.msra.mxu0 %v65
    %1162 = vmatprep.subr.mxu0 0.0
    %1163 = vmatpush1.msra.mxu0 %v66
    %1164 = vmatprep.subr.mxu0 0.0
    %1165 = vmatpush1.msra.mxu0 %v67
    %1166 = vmatprep.subr.mxu0 0.0
    %1167 = vmatpush1.msra.mxu0 %v68
    %1168 = vmatprep.subr.mxu0 0.0
    %1169 = vmatpush1.msra.mxu0 %v69
    %1170 = vmatprep.subr.mxu0 0.0
    %1171 = vmatpush1.msra.mxu0 %v70
    %1172 = vmatprep.subr.mxu0 0.0
    %1173 = vmatpush1.msra.mxu0 %v71
    %1174 = vmatprep.subr.mxu0 0.0
    %1175 = vmatpush1.msra.mxu0 %v72
    %1176 = vmatprep.subr.mxu0 0.0
    %1177 = vmatpush1.msra.mxu0 %v73
    %1178 = vmatprep.subr.mxu0 0.0
    %1179 = vmatpush1.msra.mxu0 %v74
    %1180 = vmatprep.subr.mxu0 0.0
    %1181 = vmatpush1.msra.mxu0 %v75
    %1182 = vmatprep.subr.mxu0 0.0
    %1183 = vmatpush1.msra.mxu0 %v76
    %1184 = vmatprep.mubr.f32.mxu0 %v904
    %1185 = vmatmul.mubr.f32.gmra.mrb[0].mxu0 %v1119
    %v1186 = vpop.f32.mrb[0].mxu0
    %v1187 = vadd.f32 %v248, %v1186
    %v1188 = vpop.f32.mrb[0].mxu0
    %1189 = vdwg.mxu0
    %v1190 = vtanh.pop %v1187
    %1191 = vmatprep.subr.mxu0 0.0
    %1192 = vmatpush1.msra.mxu0 %v78
    %1193 = vmatprep.subr.mxu0 0.0
    %1194 = vmatpush1.msra.mxu0 %v79
    %1195 = vmatprep.subr.mxu0 0.0
    %1196 = vmatpush1.msra.mxu0 %v80
    %1197 = vmatprep.subr.mxu0 0.0
    %1198 = vmatpush1.msra.mxu0 %v81
    %1199 = vmatprep.subr.mxu0 0.0
    %1200 = vmatpush1.msra.mxu0 %v82
    %1201 = vmatprep.subr.mxu0 0.0
    %1202 = vmatpush1.msra.mxu0 %v83
    %1203 = vmatprep.subr.mxu0 0.0
    %1204 = vmatpush1.msra.mxu0 %v84
    %1205 = vmatprep.subr.mxu0 0.0
    %1206 = vmatpush1.msra.mxu0 %v85
    %1207 = vmatprep.subr.mxu0 0.0
    %1208 = vmatpush1.msra.mxu0 %v86
    %1209 = vmatprep.subr.mxu0 0.0
    %1210 = vmatpush1.msra.mxu0 %v87
    %1211 = vmatprep.subr.mxu0 0.0
    %1212 = vmatpush1.msra.mxu0 %v88
    %1213 = vmatprep.subr.mxu0 0.0
    %1214 = vmatpush1.msra.mxu0 %v89
    %1215 = vmatprep.subr.mxu0 0.0
    %1216 = vmatpush1.msra.mxu0 %v90
    %1217 = vmatprep.subr.mxu0 0.0
    %1218 = vmatpush1.msra.mxu0 %v91
    %1219 = vmatprep.subr.mxu0 0.0
    %1220 = vmatpush1.msra.mxu0 %v92
    %1221 = vmatprep.subr.mxu0 0.0
    %1222 = vmatpush1.msra.mxu0 %v93
    %1223 = vmatprep.subr.mxu0 0.0
    %1224 = vmatpush1.msra.mxu0 %v94
    %1225 = vmatprep.subr.mxu0 0.0
    %1226 = vmatpush1.msra.mxu0 %v95
    %1227 = vmatprep.subr.mxu0 0.0
    %1228 = vmatpush1.msra.mxu0 %v96
    %1229 = vmatprep.subr.mxu0 0.0
    %1230 = vmatpush1.msra.mxu0 %v97
    %1231 = vmatprep.subr.mxu0 0.0
    %1232 = vmatpush1.msra.mxu0 %v98
    %1233 = vmatprep.subr.mxu0 0.0
    %1234 = vmatpush1.msra.mxu0 %v99
    %1235 = vmatprep.subr.mxu0 0.0
    %1236 = vmatpush1.msra.mxu0 %v100
    %1237 = vmatprep.subr.mxu0 0.0
    %1238 = vmatpush1.msra.mxu0 %v101
    %1239 = vmatprep.subr.mxu0 0.0
    %1240 = vmatpush1.msra.mxu0 %v102
    %1241 = vmatprep.subr.mxu0 0.0
    %1242 = vmatpush1.msra.mxu0 %v103
    %1243 = vmatprep.subr.mxu0 0.0
    %1244 = vmatpush1.msra.mxu0 %v104
    %1245 = vmatprep.subr.mxu0 0.0
    %1246 = vmatpush1.msra.mxu0 %v105
    %1247 = vmatprep.subr.mxu0 0.0
    %1248 = vmatpush1.msra.mxu0 %v106
    %1249 = vmatprep.subr.mxu0 0.0
    %1250 = vmatpush1.msra.mxu0 %v107
    %1251 = vmatprep.subr.mxu0 0.0
    %1252 = vmatpush1.msra.mxu0 %v108
    %1253 = vmatprep.subr.mxu0 0.0
    %1254 = vmatpush1.msra.mxu0 %v109
    %1255 = vmatprep.mubr.f32.mxu0 %v975
    %1256 = vmatmul.mubr.f32.gmra.mrb[0].mxu0 %v1190
    %v1257 = vpop.f32.mrb[0].mxu0
    %v1258 = vadd.f32 %v325, %v1257
    %v1259 = vpop.f32.mrb[0].mxu0
    %1260 = vdwg.mxu0
    %v1261 = vtanh.pop %v1258
    %1262 = vmatprep.subr.mxu0 0.0
    %1263 = vmatpush1.msra.mxu0 %v111
    %1264 = vmatprep.subr.mxu0 0.0
    %1265 = vmatpush1.msra.mxu0 %v112
    %1266 = vmatprep.subr.mxu0 0.0
    %1267 = vmatpush1.msra.mxu0 %v113
    %1268 = vmatprep.subr.mxu0 0.0
    %1269 = vmatpush1.msra.mxu0 %v114
    %1270 = vmatprep.subr.mxu0 0.0
    %1271 = vmatpush1.msra.mxu0 %v115
    %1272 = vmatprep.subr.mxu0 0.0
    %1273 = vmatpush1.msra.mxu0 %v116
    %1274 = vmatprep.subr.mxu0 0.0
    %1275 = vmatpush1.msra.mxu0 %v117
    %1276 = vmatprep.subr.mxu0 0.0
    %1277 = vmatpush1.msra.mxu0 %v118
    %1278 = vmatprep.subr.mxu0 0.0
    %1279 = vmatpush1.msra.mxu0 %v119
    %1280 = vmatprep.subr.mxu0 0.0
    %1281 = vmatpush1.msra.mxu0 %v120
    %1282 = vmatprep.subr.mxu0 0.0
    %1283 = vmatpush1.msra.mxu0 %v121
    %1284 = vmatprep.subr.mxu0 0.0
    %1285 = vmatpush1.msra.mxu0 %v122
    %1286 = vmatprep.subr.mxu0 0.0
    %1287 = vmatpush1.msra.mxu0 %v123
    %1288 = vmatprep.subr.mxu0 0.0
    %1289 = vmatpush1.msra.mxu0 %v124
    %1290 = vmatprep.subr.mxu0 0.0
    %1291 = vmatpush1.msra.mxu0 %v125
    %1292 = vmatprep.subr.mxu0 0.0
    %1293 = vmatpush1.msra.mxu0 %v126
    %1294 = vmatprep.subr.mxu0 0.0
    %1295 = vmatpush1.msra.mxu0 %v127
    %1296 = vmatprep.subr.mxu0 0.0
    %1297 = vmatpush1.msra.mxu0 %v128
    %1298 = vmatprep.subr.mxu0 0.0
    %1299 = vmatpush1.msra.mxu0 %v129
    %1300 = vmatprep.subr.mxu0 0.0
    %1301 = vmatpush1.msra.mxu0 %v130
    %1302 = vmatprep.subr.mxu0 0.0
    %1303 = vmatpush1.msra.mxu0 %v131
    %1304 = vmatprep.subr.mxu0 0.0
    %1305 = vmatpush1.msra.mxu0 %v132
    %1306 = vmatprep.subr.mxu0 0.0
    %1307 = vmatpush1.msra.mxu0 %v133
    %1308 = vmatprep.subr.mxu0 0.0
    %1309 = vmatpush1.msra.mxu0 %v134
    %1310 = vmatprep.subr.mxu0 0.0
    %1311 = vmatpush1.msra.mxu0 %v135
    %1312 = vmatprep.subr.mxu0 0.0
    %1313 = vmatpush1.msra.mxu0 %v136
    %1314 = vmatprep.subr.mxu0 0.0
    %1315 = vmatpush1.msra.mxu0 %v137
    %1316 = vmatprep.subr.mxu0 0.0
    %1317 = vmatpush1.msra.mxu0 %v138
    %1318 = vmatprep.subr.mxu0 0.0
    %1319 = vmatpush1.msra.mxu0 %v139
    %1320 = vmatprep.subr.mxu0 0.0
    %1321 = vmatpush1.msra.mxu0 %v140
    %1322 = vmatprep.subr.mxu0 0.0
    %1323 = vmatpush1.msra.mxu0 %v141
    %1324 = vmatprep.subr.mxu0 0.0
    %1325 = vmatpush1.msra.mxu0 %v142
    %1326 = vmatprep.mubr.f32.mxu0 %v1046
    %1327 = vmatmul.mubr.f32.gmra.mrb[0].mxu0 %v1261
    %v1328 = vpop.f32.mrb[0].mxu0
    %v1329 = vadd.f32 %v402, %v1328
    %v1330 = vpop.f32.mrb[0].mxu0
    %1331 = vdwg.mxu0
    %v1332 = vtanh.pop %v1329
    %s1333 = scalar_lea.vmem %s0, 8
    %v1334 = vld [vmem:[%s1333] sm:$0x3]
    %1335 = vmatprep.subr.mxu0 0.0
    %1336 = vmatpush1.msra.mxu0 %v29
    %1337 = vmatprep.subr.mxu0 0.0
    %1338 = vmatpush1.msra.mxu0 %v30
    %1339 = vmatprep.subr.mxu0 0.0
    %1340 = vmatpush1.msra.mxu0 %v31
    %1341 = vmatprep.subr.mxu0 0.0
    %1342 = vmatpush1.msra.mxu0 %v32
    %1343 = vmatprep.subr.mxu0 0.0
    %1344 = vmatpush1.msra.mxu0 %v33
    %1345 = vmatprep.subr.mxu0 0.0
    %1346 = vmatpush1.msra.mxu0 %v34
    %1347 = vmatprep.subr.mxu0 0.0
    %1348 = vmatpush1.msra.mxu0 %v35
    %1349 = vmatprep.subr.mxu0 0.0
    %1350 = vmatpush1.msra.mxu0 %v36
    %1351 = vmatprep.subr.mxu0 0.0
    %1352 = vmatpush1.msra.mxu0 %v37
    %1353 = vmatprep.subr.mxu0 0.0
    %1354 = vmatpush1.msra.mxu0 %v38
    %1355 = vmatprep.subr.mxu0 0.0
    %1356 = vmatpush1.msra.mxu0 %v39
    %1357 = vmatprep.subr.mxu0 0.0
    %1358 = vmatpush1.msra.mxu0 %v40
    %1359 = vmatprep.subr.mxu0 0.0
    %1360 = vmatpush1.msra.mxu0 %v41
    %1361 = vmatprep.subr.mxu0 0.0
    %1362 = vmatpush1.msra.mxu0 %v42
    %1363 = vmatprep.subr.mxu0 0.0
    %1364 = vmatpush1.msra.mxu0 %v43
    %1365 = vmatprep.subr.mxu0 0.0
    %1366 = vmatpush1.msra.mxu0 %v44
    %1367 = vmatprep.subr.mxu0 0.0
    %1368 = vmatpush1.msra.mxu0 0.0
    %1369 = vmatprep.subr.mxu0 0.0
    %1370 = vmatpush1.msra.mxu0 0.0
    %1371 = vmatprep.subr.mxu0 0.0
    %1372 = vmatpush1.msra.mxu0 0.0
    %1373 = vmatprep.subr.mxu0 0.0
    %1374 = vmatpush1.msra.mxu0 0.0
    %1375 = vmatprep.subr.mxu0 0.0
    %1376 = vmatpush1.msra.mxu0 0.0
    %1377 = vmatprep.subr.mxu0 0.0
    %1378 = vmatpush1.msra.mxu0 0.0
    %1379 = vmatprep.subr.mxu0 0.0
    %1380 = vmatpush1.msra.mxu0 0.0
    %1381 = vmatprep.subr.mxu0 0.0
    %1382 = vmatpush1.msra.mxu0 0.0
    %1383 = vmatprep.subr.mxu0 0.0
    %1384 = vmatpush1.msra.mxu0 0.0
    %1385 = vmatprep.subr.mxu0 0.0
    %1386 = vmatpush1.msra.mxu0 0.0
    %1387 = vmatprep.subr.mxu0 0.0
    %1388 = vmatpush1.msra.mxu0 0.0
    %1389 = vmatprep.subr.mxu0 0.0
    %1390 = vmatpush1.msra.mxu0 0.0
    %1391 = vmatprep.subr.mxu0 0.0
    %1392 = vmatpush1.msra.mxu0 0.0
    %1393 = vmatprep.subr.mxu0 0.0
    %1394 = vmatpush1.msra.mxu0 0.0
    %1395 = vmatprep.subr.mxu0 0.0
    %1396 = vmatpush1.msra.mxu0 0.0
    %1397 = vmatprep.subr.mxu0 0.0
    %1398 = vmatpush1.msra.mxu0 0.0
    %1399 = vmatprep.mubr.f32.mxu0 0.0
    %1400 = vmatmul.mubr.f32.gmra.mrb[0].mxu0 %v1119
    %v1401 = vpop.f32.mrb[0].mxu0
    %v1402 = vadd.f32 %v1334, %v1401
    %v1403 = vpop.f32.mrb[0].mxu0
    %1404 = vdwg.mxu0
    %v1405 = vtanh.pop %v1402
    %1406 = vmatprep.subr.mxu0 0.0
    %1407 = vmatpush1.msra.mxu0 %v45
    %1408 = vmatprep.subr.mxu0 0.0
    %1409 = vmatpush1.msra.mxu0 %v46
    %1410 = vmatprep.subr.mxu0 0.0
    %1411 = vmatpush1.msra.mxu0 %v47
    %1412 = vmatprep.subr.mxu0 0.0
    %1413 = vmatpush1.msra.mxu0 %v48
    %1414 = vmatprep.subr.mxu0 0.0
    %1415 = vmatpush1.msra.mxu0 %v49
    %1416 = vmatprep.subr.mxu0 0.0
    %1417 = vmatpush1.msra.mxu0 %v50
    %1418 = vmatprep.subr.mxu0 0.0
    %1419 = vmatpush1.msra.mxu0 %v51
    %1420 = vmatprep.subr.mxu0 0.0
    %1421 = vmatpush1.msra.mxu0 %v52
    %1422 = vmatprep.subr.mxu0 0.0
    %1423 = vmatpush1.msra.mxu0 %v53
    %1424 = vmatprep.subr.mxu0 0.0
    %1425 = vmatpush1.msra.mxu0 %v54
    %1426 = vmatprep.subr.mxu0 0.0
    %1427 = vmatpush1.msra.mxu0 %v55
    %1428 = vmatprep.subr.mxu0 0.0
    %1429 = vmatpush1.msra.mxu0 %v56
    %1430 = vmatprep.subr.mxu0 0.0
    %1431 = vmatpush1.msra.mxu0 %v57
    %1432 = vmatprep.subr.mxu0 0.0
    %1433 = vmatpush1.msra.mxu0 %v58
    %1434 = vmatprep.subr.mxu0 0.0
    %1435 = vmatpush1.msra.mxu0 %v59
    %1436 = vmatprep.subr.mxu0 0.0
    %1437 = vmatpush1.msra.mxu0 %v60
    %1438 = vmatprep.subr.mxu0 0.0
    %1439 = vmatpush1.msra.mxu0 %v61
    %1440 = vmatprep.subr.mxu0 0.0
    %1441 = vmatpush1.msra.mxu0 %v62
    %1442 = vmatprep.subr.mxu0 0.0
    %1443 = vmatpush1.msra.mxu0 %v63
    %1444 = vmatprep.subr.mxu0 0.0
    %1445 = vmatpush1.msra.mxu0 %v64
    %1446 = vmatprep.subr.mxu0 0.0
    %1447 = vmatpush1.msra.mxu0 %v65
    %1448 = vmatprep.subr.mxu0 0.0
    %1449 = vmatpush1.msra.mxu0 %v66
    %1450 = vmatprep.subr.mxu0 0.0
    %1451 = vmatpush1.msra.mxu0 %v67
    %1452 = vmatprep.subr.mxu0 0.0
    %1453 = vmatpush1.msra.mxu0 %v68
    %1454 = vmatprep.subr.mxu0 0.0
    %1455 = vmatpush1.msra.mxu0 %v69
    %1456 = vmatprep.subr.mxu0 0.0
    %1457 = vmatpush1.msra.mxu0 %v70
    %1458 = vmatprep.subr.mxu0 0.0
    %1459 = vmatpush1.msra.mxu0 %v71
    %1460 = vmatprep.subr.mxu0 0.0
    %1461 = vmatpush1.msra.mxu0 %v72
    %1462 = vmatprep.subr.mxu0 0.0
    %1463 = vmatpush1.msra.mxu0 %v73
    %1464 = vmatprep.subr.mxu0 0.0
    %1465 = vmatpush1.msra.mxu0 %v74
    %1466 = vmatprep.subr.mxu0 0.0
    %1467 = vmatpush1.msra.mxu0 %v75
    %1468 = vmatprep.subr.mxu0 0.0
    %1469 = vmatpush1.msra.mxu0 %v76
    %1470 = vmatprep.mubr.f32.mxu0 %v1190
    %1471 = vmatmul.mubr.f32.gmra.mrb[0].mxu0 %v1405
    %v1472 = vpop.f32.mrb[0].mxu0
    %v1473 = vadd.f32 %v248, %v1472
    %v1474 = vpop.f32.mrb[0].mxu0
    %1475 = vdwg.mxu0
    %v1476 = vtanh.pop %v1473
    %1477 = vmatprep.subr.mxu0 0.0
    %1478 = vmatpush1.msra.mxu0 %v78
    %1479 = vmatprep.subr.mxu0 0.0
    %1480 = vmatpush1.msra.mxu0 %v79
    %1481 = vmatprep.subr.mxu0 0.0
    %1482 = vmatpush1.msra.mxu0 %v80
    %1483 = vmatprep.subr.mxu0 0.0
    %1484 = vmatpush1.msra.mxu0 %v81
    %1485 = vmatprep.subr.mxu0 0.0
    %1486 = vmatpush1.msra.mxu0 %v82
    %1487 = vmatprep.subr.mxu0 0.0
    %1488 = vmatpush1.msra.mxu0 %v83
    %1489 = vmatprep.subr.mxu0 0.0
    %1490 = vmatpush1.msra.mxu0 %v84
    %1491 = vmatprep.subr.mxu0 0.0
    %1492 = vmatpush1.msra.mxu0 %v85
    %1493 = vmatprep.subr.mxu0 0.0
    %1494 = vmatpush1.msra.mxu0 %v86
    %1495 = vmatprep.subr.mxu0 0.0
    %1496 = vmatpush1.msra.mxu0 %v87
    %1497 = vmatprep.subr.mxu0 0.0
    %1498 = vmatpush1.msra.mxu0 %v88
    %1499 = vmatprep.subr.mxu0 0.0
    %1500 = vmatpush1.msra.mxu0 %v89
    %1501 = vmatprep.subr.mxu0 0.0
    %1502 = vmatpush1.msra.mxu0 %v90
    %1503 = vmatprep.subr.mxu0 0.0
    %1504 = vmatpush1.msra.mxu0 %v91
    %1505 = vmatprep.subr.mxu0 0.0
    %1506 = vmatpush1.msra.mxu0 %v92
    %1507 = vmatprep.subr.mxu0 0.0
    %1508 = vmatpush1.msra.mxu0 %v93
    %1509 = vmatprep.subr.mxu0 0.0
    %1510 = vmatpush1.msra.mxu0 %v94
    %1511 = vmatprep.subr.mxu0 0.0
    %1512 = vmatpush1.msra.mxu0 %v95
    %1513 = vmatprep.subr.mxu0 0.0
    %1514 = vmatpush1.msra.mxu0 %v96
    %1515 = vmatprep.subr.mxu0 0.0
    %1516 = vmatpush1.msra.mxu0 %v97
    %1517 = vmatprep.subr.mxu0 0.0
    %1518 = vmatpush1.msra.mxu0 %v98
    %1519 = vmatprep.subr.mxu0 0.0
    %1520 = vmatpush1.msra.mxu0 %v99
    %1521 = vmatprep.subr.mxu0 0.0
    %1522 = vmatpush1.msra.mxu0 %v100
    %1523 = vmatprep.subr.mxu0 0.0
    %1524 = vmatpush1.msra.mxu0 %v101
    %1525 = vmatprep.subr.mxu0 0.0
    %1526 = vmatpush1.msra.mxu0 %v102
    %1527 = vmatprep.subr.mxu0 0.0
    %1528 = vmatpush1.msra.mxu0 %v103
    %1529 = vmatprep.subr.mxu0 0.0
    %1530 = vmatpush1.msra.mxu0 %v104
    %1531 = vmatprep.subr.mxu0 0.0
    %1532 = vmatpush1.msra.mxu0 %v105
    %1533 = vmatprep.subr.mxu0 0.0
    %1534 = vmatpush1.msra.mxu0 %v106
    %1535 = vmatprep.subr.mxu0 0.0
    %1536 = vmatpush1.msra.mxu0 %v107
    %1537 = vmatprep.subr.mxu0 0.0
    %1538 = vmatpush1.msra.mxu0 %v108
    %1539 = vmatprep.subr.mxu0 0.0
    %1540 = vmatpush1.msra.mxu0 %v109
    %1541 = vmatprep.mubr.f32.mxu0 %v1261
    %1542 = vmatmul.mubr.f32.gmra.mrb[0].mxu0 %v1476
    %v1543 = vpop.f32.mrb[0].mxu0
    %v1544 = vadd.f32 %v325, %v1543
    %v1545 = vpop.f32.mrb[0].mxu0
    %1546 = vdwg.mxu0
    %v1547 = vtanh.pop %v1544
    %1548 = vmatprep.subr.mxu0 0.0
    %1549 = vmatpush1.msra.mxu0 %v111
    %1550 = vmatprep.subr.mxu0 0.0
    %1551 = vmatpush1.msra.mxu0 %v112
    %1552 = vmatprep.subr.mxu0 0.0
    %1553 = vmatpush1.msra.mxu0 %v113
    %1554 = vmatprep.subr.mxu0 0.0
    %1555 = vmatpush1.msra.mxu0 %v114
    %1556 = vmatprep.subr.mxu0 0.0
    %1557 = vmatpush1.msra.mxu0 %v115
    %1558 = vmatprep.subr.mxu0 0.0
    %1559 = vmatpush1.msra.mxu0 %v116
    %1560 = vmatprep.subr.mxu0 0.0
    %1561 = vmatpush1.msra.mxu0 %v117
    %1562 = vmatprep.subr.mxu0 0.0
    %1563 = vmatpush1.msra.mxu0 %v118
    %1564 = vmatprep.subr.mxu0 0.0
    %1565 = vmatpush1.msra.mxu0 %v119
    %1566 = vmatprep.subr.mxu0 0.0
    %1567 = vmatpush1.msra.mxu0 %v120
    %1568 = vmatprep.subr.mxu0 0.0
    %1569 = vmatpush1.msra.mxu0 %v121
    %1570 = vmatprep.subr.mxu0 0.0
    %1571 = vmatpush1.msra.mxu0 %v122
    %1572 = vmatprep.subr.mxu0 0.0
    %1573 = vmatpush1.msra.mxu0 %v123
    %1574 = vmatprep.subr.mxu0 0.0
    %1575 = vmatpush1.msra.mxu0 %v124
    %1576 = vmatprep.subr.mxu0 0.0
    %1577 = vmatpush1.msra.mxu0 %v125
    %1578 = vmatprep.subr.mxu0 0.0
    %1579 = vmatpush1.msra.mxu0 %v126
    %1580 = vmatprep.subr.mxu0 0.0
    %1581 = vmatpush1.msra.mxu0 %v127
    %1582 = vmatprep.subr.mxu0 0.0
    %1583 = vmatpush1.msra.mxu0 %v128
    %1584 = vmatprep.subr.mxu0 0.0
    %1585 = vmatpush1.msra.mxu0 %v129
    %1586 = vmatprep.subr.mxu0 0.0
    %1587 = vmatpush1.msra.mxu0 %v130
    %1588 = vmatprep.subr.mxu0 0.0
    %1589 = vmatpush1.msra.mxu0 %v131
    %1590 = vmatprep.subr.mxu0 0.0
    %1591 = vmatpush1.msra.mxu0 %v132
    %1592 = vmatprep.subr.mxu0 0.0
    %1593 = vmatpush1.msra.mxu0 %v133
    %1594 = vmatprep.subr.mxu0 0.0
    %1595 = vmatpush1.msra.mxu0 %v134
    %1596 = vmatprep.subr.mxu0 0.0
    %1597 = vmatpush1.msra.mxu0 %v135
    %1598 = vmatprep.subr.mxu0 0.0
    %1599 = vmatpush1.msra.mxu0 %v136
    %1600 = vmatprep.subr.mxu0 0.0
    %1601 = vmatpush1.msra.mxu0 %v137
    %1602 = vmatprep.subr.mxu0 0.0
    %1603 = vmatpush1.msra.mxu0 %v138
    %1604 = vmatprep.subr.mxu0 0.0
    %1605 = vmatpush1.msra.mxu0 %v139
    %1606 = vmatprep.subr.mxu0 0.0
    %1607 = vmatpush1.msra.mxu0 %v140
    %1608 = vmatprep.subr.mxu0 0.0
    %1609 = vmatpush1.msra.mxu0 %v141
    %1610 = vmatprep.subr.mxu0 0.0
    %1611 = vmatpush1.msra.mxu0 %v142
    %1612 = vmatprep.mubr.f32.mxu0 %v1332
    %1613 = vmatmul.mubr.f32.gmra.mrb[0].mxu0 %v1547
    %v1614 = vpop.f32.mrb[0].mxu0
    %v1615 = vadd.f32 %v402, %v1614
    %v1616 = vpop.f32.mrb[0].mxu0
    %1617 = vdwg.mxu0
    %v1618 = vtanh.pop %v1615
    %s1619 = scalar_lea.vmem %s0, 10
    %v1620 = vld [vmem:[%s1619] sm:$0x3]
    %1621 = vmatprep.subr.mxu0 0.0
    %1622 = vmatpush1.msra.mxu0 %v29
    %1623 = vmatprep.subr.mxu0 0.0
    %1624 = vmatpush1.msra.mxu0 %v30
    %1625 = vmatprep.subr.mxu0 0.0
    %1626 = vmatpush1.msra.mxu0 %v31
    %1627 = vmatprep.subr.mxu0 0.0
    %1628 = vmatpush1.msra.mxu0 %v32
    %1629 = vmatprep.subr.mxu0 0.0
    %1630 = vmatpush1.msra.mxu0 %v33
    %1631 = vmatprep.subr.mxu0 0.0
    %1632 = vmatpush1.msra.mxu0 %v34
    %1633 = vmatprep.subr.mxu0 0.0
    %1634 = vmatpush1.msra.mxu0 %v35
    %1635 = vmatprep.subr.mxu0 0.0
    %1636 = vmatpush1.msra.mxu0 %v36
    %1637 = vmatprep.subr.mxu0 0.0
    %1638 = vmatpush1.msra.mxu0 %v37
    %1639 = vmatprep.subr.mxu0 0.0
    %1640 = vmatpush1.msra.mxu0 %v38
    %1641 = vmatprep.subr.mxu0 0.0
    %1642 = vmatpush1.msra.mxu0 %v39
    %1643 = vmatprep.subr.mxu0 0.0
    %1644 = vmatpush1.msra.mxu0 %v40
    %1645 = vmatprep.subr.mxu0 0.0
    %1646 = vmatpush1.msra.mxu0 %v41
    %1647 = vmatprep.subr.mxu0 0.0
    %1648 = vmatpush1.msra.mxu0 %v42
    %1649 = vmatprep.subr.mxu0 0.0
    %1650 = vmatpush1.msra.mxu0 %v43
    %1651 = vmatprep.subr.mxu0 0.0
    %1652 = vmatpush1.msra.mxu0 %v44
    %1653 = vmatprep.subr.mxu0 0.0
    %1654 = vmatpush1.msra.mxu0 0.0
    %1655 = vmatprep.subr.mxu0 0.0
    %1656 = vmatpush1.msra.mxu0 0.0
    %1657 = vmatprep.subr.mxu0 0.0
    %1658 = vmatpush1.msra.mxu0 0.0
    %1659 = vmatprep.subr.mxu0 0.0
    %1660 = vmatpush1.msra.mxu0 0.0
    %1661 = vmatprep.subr.mxu0 0.0
    %1662 = vmatpush1.msra.mxu0 0.0
    %1663 = vmatprep.subr.mxu0 0.0
    %1664 = vmatpush1.msra.mxu0 0.0
    %1665 = vmatprep.subr.mxu0 0.0
    %1666 = vmatpush1.msra.mxu0 0.0
    %1667 = vmatprep.subr.mxu0 0.0
    %1668 = vmatpush1.msra.mxu0 0.0
    %1669 = vmatprep.subr.mxu0 0.0
    %1670 = vmatpush1.msra.mxu0 0.0
    %1671 = vmatprep.subr.mxu0 0.0
    %1672 = vmatpush1.msra.mxu0 0.0
    %1673 = vmatprep.subr.mxu0 0.0
    %1674 = vmatpush1.msra.mxu0 0.0
    %1675 = vmatprep.subr.mxu0 0.0
    %1676 = vmatpush1.msra.mxu0 0.0
    %1677 = vmatprep.subr.mxu0 0.0
    %1678 = vmatpush1.msra.mxu0 0.0
    %1679 = vmatprep.subr.mxu0 0.0
    %1680 = vmatpush1.msra.mxu0 0.0
    %1681 = vmatprep.subr.mxu0 0.0
    %1682 = vmatpush1.msra.mxu0 0.0
    %1683 = vmatprep.subr.mxu0 0.0
    %1684 = vmatpush1.msra.mxu0 0.0
    %1685 = vmatprep.mubr.f32.mxu0 0.0
    %1686 = vmatmul.mubr.f32.gmra.mrb[0].mxu0 %v1405
    %v1687 = vpop.f32.mrb[0].mxu0
    %v1688 = vadd.f32 %v1620, %v1687
    %v1689 = vpop.f32.mrb[0].mxu0
    %1690 = vdwg.mxu0
    %v1691 = vtanh.pop %v1688
    %1692 = vmatprep.subr.mxu0 0.0
    %1693 = vmatpush1.msra.mxu0 %v45
    %1694 = vmatprep.subr.mxu0 0.0
    %1695 = vmatpush1.msra.mxu0 %v46
    %1696 = vmatprep.subr.mxu0 0.0
    %1697 = vmatpush1.msra.mxu0 %v47
    %1698 = vmatprep.subr.mxu0 0.0
    %1699 = vmatpush1.msra.mxu0 %v48
    %1700 = vmatprep.subr.mxu0 0.0
    %1701 = vmatpush1.msra.mxu0 %v49
    %1702 = vmatprep.subr.mxu0 0.0
    %1703 = vmatpush1.msra.mxu0 %v50
    %1704 = vmatprep.subr.mxu0 0.0
    %1705 = vmatpush1.msra.mxu0 %v51
    %1706 = vmatprep.subr.mxu0 0.0
    %1707 = vmatpush1.msra.mxu0 %v52
    %1708 = vmatprep.subr.mxu0 0.0
    %1709 = vmatpush1.msra.mxu0 %v53
    %1710 = vmatprep.subr.mxu0 0.0
    %1711 = vmatpush1.msra.mxu0 %v54
    %1712 = vmatprep.subr.mxu0 0.0
    %1713 = vmatpush1.msra.mxu0 %v55
    %1714 = vmatprep.subr.mxu0 0.0
    %1715 = vmatpush1.msra.mxu0 %v56
    %1716 = vmatprep.subr.mxu0 0.0
    %1717 = vmatpush1.msra.mxu0 %v57
    %1718 = vmatprep.subr.mxu0 0.0
    %1719 = vmatpush1.msra.mxu0 %v58
    %1720 = vmatprep.subr.mxu0 0.0
    %1721 = vmatpush1.msra.mxu0 %v59
    %1722 = vmatprep.subr.mxu0 0.0
    %1723 = vmatpush1.msra.mxu0 %v60
    %1724 = vmatprep.subr.mxu0 0.0
    %1725 = vmatpush1.msra.mxu0 %v61
    %1726 = vmatprep.subr.mxu0 0.0
    %1727 = vmatpush1.msra.mxu0 %v62
    %1728 = vmatprep.subr.mxu0 0.0
    %1729 = vmatpush1.msra.mxu0 %v63
    %1730 = vmatprep.subr.mxu0 0.0
    %1731 = vmatpush1.msra.mxu0 %v64
    %1732 = vmatprep.subr.mxu0 0.0
    %1733 = vmatpush1.msra.mxu0 %v65
    %1734 = vmatprep.subr.mxu0 0.0
    %1735 = vmatpush1.msra.mxu0 %v66
    %1736 = vmatprep.subr.mxu0 0.0
    %1737 = vmatpush1.msra.mxu0 %v67
    %1738 = vmatprep.subr.mxu0 0.0
    %1739 = vmatpush1.msra.mxu0 %v68
    %1740 = vmatprep.subr.mxu0 0.0
    %1741 = vmatpush1.msra.mxu0 %v69
    %1742 = vmatprep.subr.mxu0 0.0
    %1743 = vmatpush1.msra.mxu0 %v70
    %1744 = vmatprep.subr.mxu0 0.0
    %1745 = vmatpush1.msra.mxu0 %v71
    %1746 = vmatprep.subr.mxu0 0.0
    %1747 = vmatpush1.msra.mxu0 %v72
    %1748 = vmatprep.subr.mxu0 0.0
    %1749 = vmatpush1.msra.mxu0 %v73
    %1750 = vmatprep.subr.mxu0 0.0
    %1751 = vmatpush1.msra.mxu0 %v74
    %1752 = vmatprep.subr.mxu0 0.0
    %1753 = vmatpush1.msra.mxu0 %v75
    %1754 = vmatprep.subr.mxu0 0.0
    %1755 = vmatpush1.msra.mxu0 %v76
    %1756 = vmatprep.mubr.f32.mxu0 %v1476
    %1757 = vmatmul.mubr.f32.gmra.mrb[0].mxu0 %v1691
    %v1758 = vpop.f32.mrb[0].mxu0
    %v1759 = vadd.f32 %v248, %v1758
    %v1760 = vpop.f32.mrb[0].mxu0
    %1761 = vdwg.mxu0
    %v1762 = vtanh.pop %v1759
    %1763 = vmatprep.subr.mxu0 0.0
    %1764 = vmatpush1.msra.mxu0 %v78
    %1765 = vmatprep.subr.mxu0 0.0
    %1766 = vmatpush1.msra.mxu0 %v79
    %1767 = vmatprep.subr.mxu0 0.0
    %1768 = vmatpush1.msra.mxu0 %v80
    %1769 = vmatprep.subr.mxu0 0.0
    %1770 = vmatpush1.msra.mxu0 %v81
    %1771 = vmatprep.subr.mxu0 0.0
    %1772 = vmatpush1.msra.mxu0 %v82
    %1773 = vmatprep.subr.mxu0 0.0
    %1774 = vmatpush1.msra.mxu0 %v83
    %1775 = vmatprep.subr.mxu0 0.0
    %1776 = vmatpush1.msra.mxu0 %v84
    %1777 = vmatprep.subr.mxu0 0.0
    %1778 = vmatpush1.msra.mxu0 %v85
    %1779 = vmatprep.subr.mxu0 0.0
    %1780 = vmatpush1.msra.mxu0 %v86
    %1781 = vmatprep.subr.mxu0 0.0
    %1782 = vmatpush1.msra.mxu0 %v87
    %1783 = vmatprep.subr.mxu0 0.0
    %1784 = vmatpush1.msra.mxu0 %v88
    %1785 = vmatprep.subr.mxu0 0.0
    %1786 = vmatpush1.msra.mxu0 %v89
    %1787 = vmatprep.subr.mxu0 0.0
    %1788 = vmatpush1.msra.mxu0 %v90
    %1789 = vmatprep.subr.mxu0 0.0
    %1790 = vmatpush1.msra.mxu0 %v91
    %1791 = vmatprep.subr.mxu0 0.0
    %1792 = vmatpush1.msra.mxu0 %v92
    %1793 = vmatprep.subr.mxu0 0.0
    %1794 = vmatpush1.msra.mxu0 %v93
    %1795 = vmatprep.subr.mxu0 0.0
    %1796 = vmatpush1.msra.mxu0 %v94
    %1797 = vmatprep.subr.mxu0 0.0
    %1798 = vmatpush1.msra.mxu0 %v95
    %1799 = vmatprep.subr.mxu0 0.0
    %1800 = vmatpush1.msra.mxu0 %v96
    %1801 = vmatprep.subr.mxu0 0.0
    %1802 = vmatpush1.msra.mxu0 %v97
    %1803 = vmatprep.subr.mxu0 0.0
    %1804 = vmatpush1.msra.mxu0 %v98
    %1805 = vmatprep.subr.mxu0 0.0
    %1806 = vmatpush1.msra.mxu0 %v99
    %1807 = vmatprep.subr.mxu0 0.0
    %1808 = vmatpush1.msra.mxu0 %v100
    %1809 = vmatprep.subr.mxu0 0.0
    %1810 = vmatpush1.msra.mxu0 %v101
    %1811 = vmatprep.subr.mxu0 0.0
    %1812 = vmatpush1.msra.mxu0 %v102
    %1813 = vmatprep.subr.mxu0 0.0
    %1814 = vmatpush1.msra.mxu0 %v103
    %1815 = vmatprep.subr.mxu0 0.0
    %1816 = vmatpush1.msra.mxu0 %v104
    %1817 = vmatprep.subr.mxu0 0.0
    %1818 = vmatpush1.msra.mxu0 %v105
    %1819 = vmatprep.subr.mxu0 0.0
    %1820 = vmatpush1.msra.mxu0 %v106
    %1821 = vmatprep.subr.mxu0 0.0
    %1822 = vmatpush1.msra.mxu0 %v107
    %1823 = vmatprep.subr.mxu0 0.0
    %1824 = vmatpush1.msra.mxu0 %v108
    %1825 = vmatprep.subr.mxu0 0.0
    %1826 = vmatpush1.msra.mxu0 %v109
    %1827 = vmatprep.mubr.f32.mxu0 %v1547
    %1828 = vmatmul.mubr.f32.gmra.mrb[0].mxu0 %v1762
    %v1829 = vpop.f32.mrb[0].mxu0
    %v1830 = vadd.f32 %v325, %v1829
    %v1831 = vpop.f32.mrb[0].mxu0
    %1832 = vdwg.mxu0
    %v1833 = vtanh.pop %v1830
    %1834 = vmatprep.subr.mxu0 0.0
    %1835 = vmatpush1.msra.mxu0 %v111
    %1836 = vmatprep.subr.mxu0 0.0
    %1837 = vmatpush1.msra.mxu0 %v112
    %1838 = vmatprep.subr.mxu0 0.0
    %1839 = vmatpush1.msra.mxu0 %v113
    %1840 = vmatprep.subr.mxu0 0.0
    %1841 = vmatpush1.msra.mxu0 %v114
    %1842 = vmatprep.subr.mxu0 0.0
    %1843 = vmatpush1.msra.mxu0 %v115
    %1844 = vmatprep.subr.mxu0 0.0
    %1845 = vmatpush1.msra.mxu0 %v116
    %1846 = vmatprep.subr.mxu0 0.0
    %1847 = vmatpush1.msra.mxu0 %v117
    %1848 = vmatprep.subr.mxu0 0.0
    %1849 = vmatpush1.msra.mxu0 %v118
    %1850 = vmatprep.subr.mxu0 0.0
    %1851 = vmatpush1.msra.mxu0 %v119
    %1852 = vmatprep.subr.mxu0 0.0
    %1853 = vmatpush1.msra.mxu0 %v120
    %1854 = vmatprep.subr.mxu0 0.0
    %1855 = vmatpush1.msra.mxu0 %v121
    %1856 = vmatprep.subr.mxu0 0.0
    %1857 = vmatpush1.msra.mxu0 %v122
    %1858 = vmatprep.subr.mxu0 0.0
    %1859 = vmatpush1.msra.mxu0 %v123
    %1860 = vmatprep.subr.mxu0 0.0
    %1861 = vmatpush1.msra.mxu0 %v124
    %1862 = vmatprep.subr.mxu0 0.0
    %1863 = vmatpush1.msra.mxu0 %v125
    %1864 = vmatprep.subr.mxu0 0.0
    %1865 = vmatpush1.msra.mxu0 %v126
    %1866 = vmatprep.subr.mxu0 0.0
    %1867 = vmatpush1.msra.mxu0 %v127
    %1868 = vmatprep.subr.mxu0 0.0
    %1869 = vmatpush1.msra.mxu0 %v128
    %1870 = vmatprep.subr.mxu0 0.0
    %1871 = vmatpush1.msra.mxu0 %v129
    %1872 = vmatprep.subr.mxu0 0.0
    %1873 = vmatpush1.msra.mxu0 %v130
    %1874 = vmatprep.subr.mxu0 0.0
    %1875 = vmatpush1.msra.mxu0 %v131
    %1876 = vmatprep.subr.mxu0 0.0
    %1877 = vmatpush1.msra.mxu0 %v132
    %1878 = vmatprep.subr.mxu0 0.0
    %1879 = vmatpush1.msra.mxu0 %v133
    %1880 = vmatprep.subr.mxu0 0.0
    %1881 = vmatpush1.msra.mxu0 %v134
    %1882 = vmatprep.subr.mxu0 0.0
    %1883 = vmatpush1.msra.mxu0 %v135
    %1884 = vmatprep.subr.mxu0 0.0
    %1885 = vmatpush1.msra.mxu0 %v136
    %1886 = vmatprep.subr.mxu0 0.0
    %1887 = vmatpush1.msra.mxu0 %v137
    %1888 = vmatprep.subr.mxu0 0.0
    %1889 = vmatpush1.msra.mxu0 %v138
    %1890 = vmatprep.subr.mxu0 0.0
    %1891 = vmatpush1.msra.mxu0 %v139
    %1892 = vmatprep.subr.mxu0 0.0
    %1893 = vmatpush1.msra.mxu0 %v140
    %1894 = vmatprep.subr.mxu0 0.0
    %1895 = vmatpush1.msra.mxu0 %v141
    %1896 = vmatprep.subr.mxu0 0.0
    %1897 = vmatpush1.msra.mxu0 %v142
    %1898 = vmatprep.mubr.f32.mxu0 %v1618
    %1899 = vmatmul.mubr.f32.gmra.mrb[0].mxu0 %v1833
    %v1900 = vpop.f32.mrb[0].mxu0
    %v1901 = vadd.f32 %v402, %v1900
    %v1902 = vpop.f32.mrb[0].mxu0
    %1903 = vdwg.mxu0
    %v1904 = vtanh.pop %v1901
    %s1905 = scalar_lea.vmem %s0, 12
    %v1906 = vld [vmem:[%s1905] sm:$0x3]
    %1907 = vmatprep.subr.mxu0 0.0
    %1908 = vmatpush1.msra.mxu0 %v29
    %1909 = vmatprep.subr.mxu0 0.0
    %1910 = vmatpush1.msra.mxu0 %v30
    %1911 = vmatprep.subr.mxu0 0.0
    %1912 = vmatpush1.msra.mxu0 %v31
    %1913 = vmatprep.subr.mxu0 0.0
    %1914 = vmatpush1.msra.mxu0 %v32
    %1915 = vmatprep.subr.mxu0 0.0
    %1916 = vmatpush1.msra.mxu0 %v33
    %1917 = vmatprep.subr.mxu0 0.0
    %1918 = vmatpush1.msra.mxu0 %v34
    %1919 = vmatprep.subr.mxu0 0.0
    %1920 = vmatpush1.msra.mxu0 %v35
    %1921 = vmatprep.subr.mxu0 0.0
    %1922 = vmatpush1.msra.mxu0 %v36
    %1923 = vmatprep.subr.mxu0 0.0
    %1924 = vmatpush1.msra.mxu0 %v37
    %1925 = vmatprep.subr.mxu0 0.0
    %1926 = vmatpush1.msra.mxu0 %v38
    %1927 = vmatprep.subr.mxu0 0.0
    %1928 = vmatpush1.msra.mxu0 %v39
    %1929 = vmatprep.subr.mxu0 0.0
    %1930 = vmatpush1.msra.mxu0 %v40
    %1931 = vmatprep.subr.mxu0 0.0
    %1932 = vmatpush1.msra.mxu0 %v41
    %1933 = vmatprep.subr.mxu0 0.0
    %1934 = vmatpush1.msra.mxu0 %v42
    %1935 = vmatprep.subr.mxu0 0.0
    %1936 = vmatpush1.msra.mxu0 %v43
    %1937 = vmatprep.subr.mxu0 0.0
    %1938 = vmatpush1.msra.mxu0 %v44
    %1939 = vmatprep.subr.mxu0 0.0
    %1940 = vmatpush1.msra.mxu0 0.0
    %1941 = vmatprep.subr.mxu0 0.0
    %1942 = vmatpush1.msra.mxu0 0.0
    %1943 = vmatprep.subr.mxu0 0.0
    %1944 = vmatpush1.msra.mxu0 0.0
    %1945 = vmatprep.subr.mxu0 0.0
    %1946 = vmatpush1.msra.mxu0 0.0
    %1947 = vmatprep.subr.mxu0 0.0
    %1948 = vmatpush1.msra.mxu0 0.0
    %1949 = vmatprep.subr.mxu0 0.0
    %1950 = vmatpush1.msra.mxu0 0.0
    %1951 = vmatprep.subr.mxu0 0.0
    %1952 = vmatpush1.msra.mxu0 0.0
    %1953 = vmatprep.subr.mxu0 0.0
    %1954 = vmatpush1.msra.mxu0 0.0
    %1955 = vmatprep.subr.mxu0 0.0
    %1956 = vmatpush1.msra.mxu0 0.0
    %1957 = vmatprep.subr.mxu0 0.0
    %1958 = vmatpush1.msra.mxu0 0.0
    %1959 = vmatprep.subr.mxu0 0.0
    %1960 = vmatpush1.msra.mxu0 0.0
    %1961 = vmatprep.subr.mxu0 0.0
    %1962 = vmatpush1.msra.mxu0 0.0
    %1963 = vmatprep.subr.mxu0 0.0
    %1964 = vmatpush1.msra.mxu0 0.0
    %1965 = vmatprep.subr.mxu0 0.0
    %1966 = vmatpush1.msra.mxu0 0.0
    %1967 = vmatprep.subr.mxu0 0.0
    %1968 = vmatpush1.msra.mxu0 0.0
    %1969 = vmatprep.subr.mxu0 0.0
    %1970 = vmatpush1.msra.mxu0 0.0
    %1971 = vmatprep.mubr.f32.mxu0 0.0
    %1972 = vmatmul.mubr.f32.gmra.mrb[0].mxu0 %v1691
    %v1973 = vpop.f32.mrb[0].mxu0
    %v1974 = vadd.f32 %v1906, %v1973
    %v1975 = vpop.f32.mrb[0].mxu0
    %1976 = vdwg.mxu0
    %v1977 = vtanh.pop %v1974
    %1978 = vmatprep.subr.mxu0 0.0
    %1979 = vmatpush1.msra.mxu0 %v45
    %1980 = vmatprep.subr.mxu0 0.0
    %1981 = vmatpush1.msra.mxu0 %v46
    %1982 = vmatprep.subr.mxu0 0.0
    %1983 = vmatpush1.msra.mxu0 %v47
    %1984 = vmatprep.subr.mxu0 0.0
    %1985 = vmatpush1.msra.mxu0 %v48
    %1986 = vmatprep.subr.mxu0 0.0
    %1987 = vmatpush1.msra.mxu0 %v49
    %1988 = vmatprep.subr.mxu0 0.0
    %1989 = vmatpush1.msra.mxu0 %v50
    %1990 = vmatprep.subr.mxu0 0.0
    %1991 = vmatpush1.msra.mxu0 %v51
    %1992 = vmatprep.subr.mxu0 0.0
    %1993 = vmatpush1.msra.mxu0 %v52
    %1994 = vmatprep.subr.mxu0 0.0
    %1995 = vmatpush1.msra.mxu0 %v53
    %1996 = vmatprep.subr.mxu0 0.0
    %1997 = vmatpush1.msra.mxu0 %v54
    %1998 = vmatprep.subr.mxu0 0.0
    %1999 = vmatpush1.msra.mxu0 %v55
    %2000 = vmatprep.subr.mxu0 0.0
    %2001 = vmatpush1.msra.mxu0 %v56
    %2002 = vmatprep.subr.mxu0 0.0
    %2003 = vmatpush1.msra.mxu0 %v57
    %2004 = vmatprep.subr.mxu0 0.0
    %2005 = vmatpush1.msra.mxu0 %v58
    %2006 = vmatprep.subr.mxu0 0.0
    %2007 = vmatpush1.msra.mxu0 %v59
    %2008 = vmatprep.subr.mxu0 0.0
    %2009 = vmatpush1.msra.mxu0 %v60
    %2010 = vmatprep.subr.mxu0 0.0
    %2011 = vmatpush1.msra.mxu0 %v61
    %2012 = vmatprep.subr.mxu0 0.0
    %2013 = vmatpush1.msra.mxu0 %v62
    %2014 = vmatprep.subr.mxu0 0.0
    %2015 = vmatpush1.msra.mxu0 %v63
    %2016 = vmatprep.subr.mxu0 0.0
    %2017 = vmatpush1.msra.mxu0 %v64
    %2018 = vmatprep.subr.mxu0 0.0
    %2019 = vmatpush1.msra.mxu0 %v65
    %2020 = vmatprep.subr.mxu0 0.0
    %2021 = vmatpush1.msra.mxu0 %v66
    %2022 = vmatprep.subr.mxu0 0.0
    %2023 = vmatpush1.msra.mxu0 %v67
    %2024 = vmatprep.subr.mxu0 0.0
    %2025 = vmatpush1.msra.mxu0 %v68
    %2026 = vmatprep.subr.mxu0 0.0
    %2027 = vmatpush1.msra.mxu0 %v69
    %2028 = vmatprep.subr.mxu0 0.0
    %2029 = vmatpush1.msra.mxu0 %v70
    %2030 = vmatprep.subr.mxu0 0.0
    %2031 = vmatpush1.msra.mxu0 %v71
    %2032 = vmatprep.subr.mxu0 0.0
    %2033 = vmatpush1.msra.mxu0 %v72
    %2034 = vmatprep.subr.mxu0 0.0
    %2035 = vmatpush1.msra.mxu0 %v73
    %2036 = vmatprep.subr.mxu0 0.0
    %2037 = vmatpush1.msra.mxu0 %v74
    %2038 = vmatprep.subr.mxu0 0.0
    %2039 = vmatpush1.msra.mxu0 %v75
    %2040 = vmatprep.subr.mxu0 0.0
    %2041 = vmatpush1.msra.mxu0 %v76
    %2042 = vmatprep.mubr.f32.mxu0 %v1762
    %2043 = vmatmul.mubr.f32.gmra.mrb[0].mxu0 %v1977
    %v2044 = vpop.f32.mrb[0].mxu0
    %v2045 = vadd.f32 %v248, %v2044
    %v2046 = vpop.f32.mrb[0].mxu0
    %2047 = vdwg.mxu0
    %v2048 = vtanh.pop %v2045
    %2049 = vmatprep.subr.mxu0 0.0
    %2050 = vmatpush1.msra.mxu0 %v78
    %2051 = vmatprep.subr.mxu0 0.0
    %2052 = vmatpush1.msra.mxu0 %v79
    %2053 = vmatprep.subr.mxu0 0.0
    %2054 = vmatpush1.msra.mxu0 %v80
    %2055 = vmatprep.subr.mxu0 0.0
    %2056 = vmatpush1.msra.mxu0 %v81
    %2057 = vmatprep.subr.mxu0 0.0
    %2058 = vmatpush1.msra.mxu0 %v82
    %2059 = vmatprep.subr.mxu0 0.0
    %2060 = vmatpush1.msra.mxu0 %v83
    %2061 = vmatprep.subr.mxu0 0.0
    %2062 = vmatpush1.msra.mxu0 %v84
    %2063 = vmatprep.subr.mxu0 0.0
    %2064 = vmatpush1.msra.mxu0 %v85
    %2065 = vmatprep.subr.mxu0 0.0
    %2066 = vmatpush1.msra.mxu0 %v86
    %2067 = vmatprep.subr.mxu0 0.0
    %2068 = vmatpush1.msra.mxu0 %v87
    %2069 = vmatprep.subr.mxu0 0.0
    %2070 = vmatpush1.msra.mxu0 %v88
    %2071 = vmatprep.subr.mxu0 0.0
    %2072 = vmatpush1.msra.mxu0 %v89
    %2073 = vmatprep.subr.mxu0 0.0
    %2074 = vmatpush1.msra.mxu0 %v90
    %2075 = vmatprep.subr.mxu0 0.0
    %2076 = vmatpush1.msra.mxu0 %v91
    %2077 = vmatprep.subr.mxu0 0.0
    %2078 = vmatpush1.msra.mxu0 %v92
    %2079 = vmatprep.subr.mxu0 0.0
    %2080 = vmatpush1.msra.mxu0 %v93
    %2081 = vmatprep.subr.mxu0 0.0
    %2082 = vmatpush1.msra.mxu0 %v94
    %2083 = vmatprep.subr.mxu0 0.0
    %2084 = vmatpush1.msra.mxu0 %v95
    %2085 = vmatprep.subr.mxu0 0.0
    %2086 = vmatpush1.msra.mxu0 %v96
    %2087 = vmatprep.subr.mxu0 0.0
    %2088 = vmatpush1.msra.mxu0 %v97
    %2089 = vmatprep.subr.mxu0 0.0
    %2090 = vmatpush1.msra.mxu0 %v98
    %2091 = vmatprep.subr.mxu0 0.0
    %2092 = vmatpush1.msra.mxu0 %v99
    %2093 = vmatprep.subr.mxu0 0.0
    %2094 = vmatpush1.msra.mxu0 %v100
    %2095 = vmatprep.subr.mxu0 0.0
    %2096 = vmatpush1.msra.mxu0 %v101
    %2097 = vmatprep.subr.mxu0 0.0
    %2098 = vmatpush1.msra.mxu0 %v102
    %2099 = vmatprep.subr.mxu0 0.0
    %2100 = vmatpush1.msra.mxu0 %v103
    %2101 = vmatprep.subr.mxu0 0.0
    %2102 = vmatpush1.msra.mxu0 %v104
    %2103 = vmatprep.subr.mxu0 0.0
    %2104 = vmatpush1.msra.mxu0 %v105
    %2105 = vmatprep.subr.mxu0 0.0
    %2106 = vmatpush1.msra.mxu0 %v106
    %2107 = vmatprep.subr.mxu0 0.0
    %2108 = vmatpush1.msra.mxu0 %v107
    %2109 = vmatprep.subr.mxu0 0.0
    %2110 = vmatpush1.msra.mxu0 %v108
    %2111 = vmatprep.subr.mxu0 0.0
    %2112 = vmatpush1.msra.mxu0 %v109
    %2113 = vmatprep.mubr.f32.mxu0 %v1833
    %2114 = vmatmul.mubr.f32.gmra.mrb[0].mxu0 %v2048
    %v2115 = vpop.f32.mrb[0].mxu0
    %v2116 = vadd.f32 %v325, %v2115
    %v2117 = vpop.f32.mrb[0].mxu0
    %2118 = vdwg.mxu0
    %v2119 = vtanh.pop %v2116
    %2120 = vmatprep.subr.mxu0 0.0
    %2121 = vmatpush1.msra.mxu0 %v111
    %2122 = vmatprep.subr.mxu0 0.0
    %2123 = vmatpush1.msra.mxu0 %v112
    %2124 = vmatprep.subr.mxu0 0.0
    %2125 = vmatpush1.msra.mxu0 %v113
    %2126 = vmatprep.subr.mxu0 0.0
    %2127 = vmatpush1.msra.mxu0 %v114
    %2128 = vmatprep.subr.mxu0 0.0
    %2129 = vmatpush1.msra.mxu0 %v115
    %2130 = vmatprep.subr.mxu0 0.0
    %2131 = vmatpush1.msra.mxu0 %v116
    %2132 = vmatprep.subr.mxu0 0.0
    %2133 = vmatpush1.msra.mxu0 %v117
    %2134 = vmatprep.subr.mxu0 0.0
    %2135 = vmatpush1.msra.mxu0 %v118
    %2136 = vmatprep.subr.mxu0 0.0
    %2137 = vmatpush1.msra.mxu0 %v119
    %2138 = vmatprep.subr.mxu0 0.0
    %2139 = vmatpush1.msra.mxu0 %v120
    %2140 = vmatprep.subr.mxu0 0.0
    %2141 = vmatpush1.msra.mxu0 %v121
    %2142 = vmatprep.subr.mxu0 0.0
    %2143 = vmatpush1.msra.mxu0 %v122
    %2144 = vmatprep.subr.mxu0 0.0
    %2145 = vmatpush1.msra.mxu0 %v123
    %2146 = vmatprep.subr.mxu0 0.0
    %2147 = vmatpush1.msra.mxu0 %v124
    %2148 = vmatprep.subr.mxu0 0.0
    %2149 = vmatpush1.msra.mxu0 %v125
    %2150 = vmatprep.subr.mxu0 0.0
    %2151 = vmatpush1.msra.mxu0 %v126
    %2152 = vmatprep.subr.mxu0 0.0
    %2153 = vmatpush1.msra.mxu0 %v127
    %2154 = vmatprep.subr.mxu0 0.0
    %2155 = vmatpush1.msra.mxu0 %v128
    %2156 = vmatprep.subr.mxu0 0.0
    %2157 = vmatpush1.msra.mxu0 %v129
    %2158 = vmatprep.subr.mxu0 0.0
    %2159 = vmatpush1.msra.mxu0 %v130
    %2160 = vmatprep.subr.mxu0 0.0
    %2161 = vmatpush1.msra.mxu0 %v131
    %2162 = vmatprep.subr.mxu0 0.0
    %2163 = vmatpush1.msra.mxu0 %v132
    %2164 = vmatprep.subr.mxu0 0.0
    %2165 = vmatpush1.msra.mxu0 %v133
    %2166 = vmatprep.subr.mxu0 0.0
    %2167 = vmatpush1.msra.mxu0 %v134
    %2168 = vmatprep.subr.mxu0 0.0
    %2169 = vmatpush1.msra.mxu0 %v135
    %2170 = vmatprep.subr.mxu0 0.0
    %2171 = vmatpush1.msra.mxu0 %v136
    %2172 = vmatprep.subr.mxu0 0.0
    %2173 = vmatpush1.msra.mxu0 %v137
    %2174 = vmatprep.subr.mxu0 0.0
    %2175 = vmatpush1.msra.mxu0 %v138
    %2176 = vmatprep.subr.mxu0 0.0
    %2177 = vmatpush1.msra.mxu0 %v139
    %2178 = vmatprep.subr.mxu0 0.0
    %2179 = vmatpush1.msra.mxu0 %v140
    %2180 = vmatprep.subr.mxu0 0.0
    %2181 = vmatpush1.msra.mxu0 %v141
    %2182 = vmatprep.subr.mxu0 0.0
    %2183 = vmatpush1.msra.mxu0 %v142
    %2184 = vmatprep.mubr.f32.mxu0 %v1904
    %2185 = vmatmul.mubr.f32.gmra.mrb[0].mxu0 %v2119
    %v2186 = vpop.f32.mrb[0].mxu0
    %v2187 = vadd.f32 %v402, %v2186
    %v2188 = vpop.f32.mrb[0].mxu0
    %2189 = vdwg.mxu0
    %v2190 = vtanh.pop %v2187
    %s2191 = scalar_lea.vmem %s0, 14
    %v2192 = vld [vmem:[%s2191] sm:$0x3]
    %2193 = vmatprep.subr.mxu0 0.0
    %2194 = vmatpush1.msra.mxu0 %v29
    %2195 = vmatprep.subr.mxu0 0.0
    %2196 = vmatpush1.msra.mxu0 %v30
    %2197 = vmatprep.subr.mxu0 0.0
    %2198 = vmatpush1.msra.mxu0 %v31
    %2199 = vmatprep.subr.mxu0 0.0
    %2200 = vmatpush1.msra.mxu0 %v32
    %2201 = vmatprep.subr.mxu0 0.0
    %2202 = vmatpush1.msra.mxu0 %v33
    %2203 = vmatprep.subr.mxu0 0.0
    %2204 = vmatpush1.msra.mxu0 %v34
    %2205 = vmatprep.subr.mxu0 0.0
    %2206 = vmatpush1.msra.mxu0 %v35
    %2207 = vmatprep.subr.mxu0 0.0
    %2208 = vmatpush1.msra.mxu0 %v36
    %2209 = vmatprep.subr.mxu0 0.0
    %2210 = vmatpush1.msra.mxu0 %v37
    %2211 = vmatprep.subr.mxu0 0.0
    %2212 = vmatpush1.msra.mxu0 %v38
    %2213 = vmatprep.subr.mxu0 0.0
    %2214 = vmatpush1.msra.mxu0 %v39
    %2215 = vmatprep.subr.mxu0 0.0
    %2216 = vmatpush1.msra.mxu0 %v40
    %2217 = vmatprep.subr.mxu0 0.0
    %2218 = vmatpush1.msra.mxu0 %v41
    %2219 = vmatprep.subr.mxu0 0.0
    %2220 = vmatpush1.msra.mxu0 %v42
    %2221 = vmatprep.subr.mxu0 0.0
    %2222 = vmatpush1.msra.mxu0 %v43
    %2223 = vmatprep.subr.mxu0 0.0
    %2224 = vmatpush1.msra.mxu0 %v44
    %2225 = vmatprep.subr.mxu0 0.0
    %2226 = vmatpush1.msra.mxu0 0.0
    %2227 = vmatprep.subr.mxu0 0.0
    %2228 = vmatpush1.msra.mxu0 0.0
    %2229 = vmatprep.subr.mxu0 0.0
    %2230 = vmatpush1.msra.mxu0 0.0
    %2231 = vmatprep.subr.mxu0 0.0
    %2232 = vmatpush1.msra.mxu0 0.0
    %2233 = vmatprep.subr.mxu0 0.0
    %2234 = vmatpush1.msra.mxu0 0.0
    %2235 = vmatprep.subr.mxu0 0.0
    %2236 = vmatpush1.msra.mxu0 0.0
    %2237 = vmatprep.subr.mxu0 0.0
    %2238 = vmatpush1.msra.mxu0 0.0
    %2239 = vmatprep.subr.mxu0 0.0
    %2240 = vmatpush1.msra.mxu0 0.0
    %2241 = vmatprep.subr.mxu0 0.0
    %2242 = vmatpush1.msra.mxu0 0.0
    %2243 = vmatprep.subr.mxu0 0.0
    %2244 = vmatpush1.msra.mxu0 0.0
    %2245 = vmatprep.subr.mxu0 0.0
    %2246 = vmatpush1.msra.mxu0 0.0
    %2247 = vmatprep.subr.mxu0 0.0
    %2248 = vmatpush1.msra.mxu0 0.0
    %2249 = vmatprep.subr.mxu0 0.0
    %2250 = vmatpush1.msra.mxu0 0.0
    %2251 = vmatprep.subr.mxu0 0.0
    %2252 = vmatpush1.msra.mxu0 0.0
    %2253 = vmatprep.subr.mxu0 0.0
    %2254 = vmatpush1.msra.mxu0 0.0
    %2255 = vmatprep.subr.mxu0 0.0
    %2256 = vmatpush1.msra.mxu0 0.0
    %2257 = vmatprep.mubr.f32.mxu0 0.0
    %2258 = vmatmul.mubr.f32.gmra.mrb[0].mxu0 %v1977
    %v2259 = vpop.f32.mrb[0].mxu0
    %v2260 = vadd.f32 %v2192, %v2259
    %v2261 = vpop.f32.mrb[0].mxu0
    %2262 = vdwg.mxu0
    %v2263 = vtanh.pop %v2260
    %2264 = vmatprep.subr.mxu0 0.0
    %2265 = vmatpush1.msra.mxu0 %v45
    %2266 = vmatprep.subr.mxu0 0.0
    %2267 = vmatpush1.msra.mxu0 %v46
    %2268 = vmatprep.subr.mxu0 0.0
    %2269 = vmatpush1.msra.mxu0 %v47
    %2270 = vmatprep.subr.mxu0 0.0
    %2271 = vmatpush1.msra.mxu0 %v48
    %2272 = vmatprep.subr.mxu0 0.0
    %2273 = vmatpush1.msra.mxu0 %v49
    %2274 = vmatprep.subr.mxu0 0.0
    %2275 = vmatpush1.msra.mxu0 %v50
    %2276 = vmatprep.subr.mxu0 0.0
    %2277 = vmatpush1.msra.mxu0 %v51
    %2278 = vmatprep.subr.mxu0 0.0
    %2279 = vmatpush1.msra.mxu0 %v52
    %2280 = vmatprep.subr.mxu0 0.0
    %2281 = vmatpush1.msra.mxu0 %v53
    %2282 = vmatprep.subr.mxu0 0.0
    %2283 = vmatpush1.msra.mxu0 %v54
    %2284 = vmatprep.subr.mxu0 0.0
    %2285 = vmatpush1.msra.mxu0 %v55
    %2286 = vmatprep.subr.mxu0 0.0
    %2287 = vmatpush1.msra.mxu0 %v56
    %2288 = vmatprep.subr.mxu0 0.0
    %2289 = vmatpush1.msra.mxu0 %v57
    %2290 = vmatprep.subr.mxu0 0.0
    %2291 = vmatpush1.msra.mxu0 %v58
    %2292 = vmatprep.subr.mxu0 0.0
    %2293 = vmatpush1.msra.mxu0 %v59
    %2294 = vmatprep.subr.mxu0 0.0
    %2295 = vmatpush1.msra.mxu0 %v60
    %2296 = vmatprep.subr.mxu0 0.0
    %2297 = vmatpush1.msra.mxu0 %v61
    %2298 = vmatprep.subr.mxu0 0.0
    %2299 = vmatpush1.msra.mxu0 %v62
    %2300 = vmatprep.subr.mxu0 0.0
    %2301 = vmatpush1.msra.mxu0 %v63
    %2302 = vmatprep.subr.mxu0 0.0
    %2303 = vmatpush1.msra.mxu0 %v64
    %2304 = vmatprep.subr.mxu0 0.0
    %2305 = vmatpush1.msra.mxu0 %v65
    %2306 = vmatprep.subr.mxu0 0.0
    %2307 = vmatpush1.msra.mxu0 %v66
    %2308 = vmatprep.subr.mxu0 0.0
    %2309 = vmatpush1.msra.mxu0 %v67
    %2310 = vmatprep.subr.mxu0 0.0
    %2311 = vmatpush1.msra.mxu0 %v68
    %2312 = vmatprep.subr.mxu0 0.0
    %2313 = vmatpush1.msra.mxu0 %v69
    %2314 = vmatprep.subr.mxu0 0.0
    %2315 = vmatpush1.msra.mxu0 %v70
    %2316 = vmatprep.subr.mxu0 0.0
    %2317 = vmatpush1.msra.mxu0 %v71
    %2318 = vmatprep.subr.mxu0 0.0
    %2319 = vmatpush1.msra.mxu0 %v72
    %2320 = vmatprep.subr.mxu0 0.0
    %2321 = vmatpush1.msra.mxu0 %v73
    %2322 = vmatprep.subr.mxu0 0.0
    %2323 = vmatpush1.msra.mxu0 %v74
    %2324 = vmatprep.subr.mxu0 0.0
    %2325 = vmatpush1.msra.mxu0 %v75
    %2326 = vmatprep.subr.mxu0 0.0
    %2327 = vmatpush1.msra.mxu0 %v76
    %2328 = vmatprep.mubr.f32.mxu0 %v2048
    %2329 = vmatmul.mubr.f32.gmra.mrb[0].mxu0 %v2263
    %v2330 = vpop.f32.mrb[0].mxu0
    %v2331 = vadd.f32 %v248, %v2330
    %v2332 = vpop.f32.mrb[0].mxu0
    %2333 = vdwg.mxu0
    %v2334 = vtanh.pop %v2331
    %2335 = vmatprep.subr.mxu0 0.0
    %2336 = vmatpush1.msra.mxu0 %v78
    %2337 = vmatprep.subr.mxu0 0.0
    %2338 = vmatpush1.msra.mxu0 %v79
    %2339 = vmatprep.subr.mxu0 0.0
    %2340 = vmatpush1.msra.mxu0 %v80
    %2341 = vmatprep.subr.mxu0 0.0
    %2342 = vmatpush1.msra.mxu0 %v81
    %2343 = vmatprep.subr.mxu0 0.0
    %2344 = vmatpush1.msra.mxu0 %v82
    %2345 = vmatprep.subr.mxu0 0.0
    %2346 = vmatpush1.msra.mxu0 %v83
    %2347 = vmatprep.subr.mxu0 0.0
    %2348 = vmatpush1.msra.mxu0 %v84
    %2349 = vmatprep.subr.mxu0 0.0
    %2350 = vmatpush1.msra.mxu0 %v85
    %2351 = vmatprep.subr.mxu0 0.0
    %2352 = vmatpush1.msra.mxu0 %v86
    %2353 = vmatprep.subr.mxu0 0.0
    %2354 = vmatpush1.msra.mxu0 %v87
    %2355 = vmatprep.subr.mxu0 0.0
    %2356 = vmatpush1.msra.mxu0 %v88
    %2357 = vmatprep.subr.mxu0 0.0
    %2358 = vmatpush1.msra.mxu0 %v89
    %2359 = vmatprep.subr.mxu0 0.0
    %2360 = vmatpush1.msra.mxu0 %v90
    %2361 = vmatprep.subr.mxu0 0.0
    %2362 = vmatpush1.msra.mxu0 %v91
    %2363 = vmatprep.subr.mxu0 0.0
    %2364 = vmatpush1.msra.mxu0 %v92
    %2365 = vmatprep.subr.mxu0 0.0
    %2366 = vmatpush1.msra.mxu0 %v93
    %2367 = vmatprep.subr.mxu0 0.0
    %2368 = vmatpush1.msra.mxu0 %v94
    %2369 = vmatprep.subr.mxu0 0.0
    %2370 = vmatpush1.msra.mxu0 %v95
    %2371 = vmatprep.subr.mxu0 0.0
    %2372 = vmatpush1.msra.mxu0 %v96
    %2373 = vmatprep.subr.mxu0 0.0
    %2374 = vmatpush1.msra.mxu0 %v97
    %2375 = vmatprep.subr.mxu0 0.0
    %2376 = vmatpush1.msra.mxu0 %v98
    %2377 = vmatprep.subr.mxu0 0.0
    %2378 = vmatpush1.msra.mxu0 %v99
    %2379 = vmatprep.subr.mxu0 0.0
    %2380 = vmatpush1.msra.mxu0 %v100
    %2381 = vmatprep.subr.mxu0 0.0
    %2382 = vmatpush1.msra.mxu0 %v101
    %2383 = vmatprep.subr.mxu0 0.0
    %2384 = vmatpush1.msra.mxu0 %v102
    %2385 = vmatprep.subr.mxu0 0.0
    %2386 = vmatpush1.msra.mxu0 %v103
    %2387 = vmatprep.subr.mxu0 0.0
    %2388 = vmatpush1.msra.mxu0 %v104
    %2389 = vmatprep.subr.mxu0 0.0
    %2390 = vmatpush1.msra.mxu0 %v105
    %2391 = vmatprep.subr.mxu0 0.0
    %2392 = vmatpush1.msra.mxu0 %v106
    %2393 = vmatprep.subr.mxu0 0.0
    %2394 = vmatpush1.msra.mxu0 %v107
    %2395 = vmatprep.subr.mxu0 0.0
    %2396 = vmatpush1.msra.mxu0 %v108
    %2397 = vmatprep.subr.mxu0 0.0
    %2398 = vmatpush1.msra.mxu0 %v109
    %2399 = vmatprep.mubr.f32.mxu0 %v2119
    %2400 = vmatmul.mubr.f32.gmra.mrb[0].mxu0 %v2334
    %v2401 = vpop.f32.mrb[0].mxu0
    %v2402 = vadd.f32 %v325, %v2401
    %v2403 = vpop.f32.mrb[0].mxu0
    %2404 = vdwg.mxu0
    %v2405 = vtanh.pop %v2402
    %2406 = vmatprep.subr.mxu0 0.0
    %2407 = vmatpush1.msra.mxu0 %v111
    %2408 = vmatprep.subr.mxu0 0.0
    %2409 = vmatpush1.msra.mxu0 %v112
    %2410 = vmatprep.subr.mxu0 0.0
    %2411 = vmatpush1.msra.mxu0 %v113
    %2412 = vmatprep.subr.mxu0 0.0
    %2413 = vmatpush1.msra.mxu0 %v114
    %2414 = vmatprep.subr.mxu0 0.0
    %2415 = vmatpush1.msra.mxu0 %v115
    %2416 = vmatprep.subr.mxu0 0.0
    %2417 = vmatpush1.msra.mxu0 %v116
    %2418 = vmatprep.subr.mxu0 0.0
    %2419 = vmatpush1.msra.mxu0 %v117
    %2420 = vmatprep.subr.mxu0 0.0
    %2421 = vmatpush1.msra.mxu0 %v118
    %2422 = vmatprep.subr.mxu0 0.0
    %2423 = vmatpush1.msra.mxu0 %v119
    %2424 = vmatprep.subr.mxu0 0.0
    %2425 = vmatpush1.msra.mxu0 %v120
    %2426 = vmatprep.subr.mxu0 0.0
    %2427 = vmatpush1.msra.mxu0 %v121
    %2428 = vmatprep.subr.mxu0 0.0
    %2429 = vmatpush1.msra.mxu0 %v122
    %2430 = vmatprep.subr.mxu0 0.0
    %2431 = vmatpush1.msra.mxu0 %v123
    %2432 = vmatprep.subr.mxu0 0.0
    %2433 = vmatpush1.msra.mxu0 %v124
    %2434 = vmatprep.subr.mxu0 0.0
    %2435 = vmatpush1.msra.mxu0 %v125
    %2436 = vmatprep.subr.mxu0 0.0
    %2437 = vmatpush1.msra.mxu0 %v126
    %2438 = vmatprep.subr.mxu0 0.0
    %2439 = vmatpush1.msra.mxu0 %v127
    %2440 = vmatprep.subr.mxu0 0.0
    %2441 = vmatpush1.msra.mxu0 %v128
    %2442 = vmatprep.subr.mxu0 0.0
    %2443 = vmatpush1.msra.mxu0 %v129
    %2444 = vmatprep.subr.mxu0 0.0
    %2445 = vmatpush1.msra.mxu0 %v130
    %2446 = vmatprep.subr.mxu0 0.0
    %2447 = vmatpush1.msra.mxu0 %v131
    %2448 = vmatprep.subr.mxu0 0.0
    %2449 = vmatpush1.msra.mxu0 %v132
    %2450 = vmatprep.subr.mxu0 0.0
    %2451 = vmatpush1.msra.mxu0 %v133
    %2452 = vmatprep.subr.mxu0 0.0
    %2453 = vmatpush1.msra.mxu0 %v134
    %2454 = vmatprep.subr.mxu0 0.0
    %2455 = vmatpush1.msra.mxu0 %v135
    %2456 = vmatprep.subr.mxu0 0.0
    %2457 = vmatpush1.msra.mxu0 %v136
    %2458 = vmatprep.subr.mxu0 0.0
    %2459 = vmatpush1.msra.mxu0 %v137
    %2460 = vmatprep.subr.mxu0 0.0
    %2461 = vmatpush1.msra.mxu0 %v138
    %2462 = vmatprep.subr.mxu0 0.0
    %2463 = vmatpush1.msra.mxu0 %v139
    %2464 = vmatprep.subr.mxu0 0.0
    %2465 = vmatpush1.msra.mxu0 %v140
    %2466 = vmatprep.subr.mxu0 0.0
    %2467 = vmatpush1.msra.mxu0 %v141
    %2468 = vmatprep.subr.mxu0 0.0
    %2469 = vmatpush1.msra.mxu0 %v142
    %2470 = vmatprep.mubr.f32.mxu0 %v2190
    %2471 = vmatmul.mubr.f32.gmra.mrb[0].mxu0 %v2405
    %v2472 = vpop.f32.mrb[0].mxu0
    %v2473 = vadd.f32 %v402, %v2472
    %v2474 = vpop.f32.mrb[0].mxu0
    %2475 = vdwg.mxu0
    %v2476 = vtanh.pop %v2473
    %2477 = vst [vmem:[#allocation2] sm:$0x3] %v2263
    %s2478 = scalar_lea.vmem [#allocation2], 2
    %2479 = vst [vmem:[%s2478] sm:$0x3] %v2334
    %s2480 = scalar_lea.vmem [#allocation2], 4
    %2481 = vst [vmem:[%s2480] sm:$0x3] %v2405
    %s2482 = scalar_lea.vmem [#allocation2], 6
    %2483 = vst [vmem:[%s2482] sm:$0x3] %v2476
    %v2485 = vrot.slane %v760, 6
    %v2488 = vrot.slane %v1046, 4
    %v2491 = vrot.slane %v1332, 2
    %v2494 = vrot.slane %v1904, 6
    %v2497 = vrot.slane %v2190, 4
    %v2500 = vrot.slane %v2476, 2
    %vm2502 = vcmask 1041408
    %v2503 = vsel %vm2502, %v474, %v2485
    %vm2504 = vcmask 1043456
    %v2505 = vsel %vm2504, %v2503, %v2488
    %vm2506 = vcmask 1045504
    %v2507 = vsel %vm2506, %v2505, %v2491
    %v2508 = vsel %vm2502, %v1618, %v2494
    %v2509 = vsel %vm2504, %v2508, %v2497
    %v2510 = vsel %vm2506, %v2509, %v2500
    %v2512 = vlaneseq
    %v2513 = vshrl.u32 %v2512, 7
    %v2514 = vsub.s32 0, %v2513
    %v2515 = vrot.slane %v164, %v2514
    %2517 = vmatprep.subr.mxu0 0.0
    %2518 = vmatpush1.msra.mxu0 %v148
    %2519 = vmatprep.subr.mxu0 0.0
    %2520 = vmatpush1.msra.mxu0 %v149
    %2521 = vmatprep.subr.mxu0 0.0
    %2522 = vmatpush1.msra.mxu0 %v150
    %2523 = vmatprep.subr.mxu0 0.0
    %2524 = vmatpush1.msra.mxu0 %v151
    %2525 = vmatprep.subr.mxu0 0.0
    %2526 = vmatpush1.msra.mxu0 %v152
    %2527 = vmatprep.subr.mxu0 0.0
    %2528 = vmatpush1.msra.mxu0 %v153
    %2529 = vmatprep.subr.mxu0 0.0
    %2530 = vmatpush1.msra.mxu0 %v154
    %2531 = vmatprep.subr.mxu0 0.0
    %2532 = vmatpush1.msra.mxu0 %v155
    %2533 = vmatprep.subr.mxu0 0.0
    %2534 = vmatpush1.msra.mxu0 %v156
    %2535 = vmatprep.subr.mxu0 0.0
    %2536 = vmatpush1.msra.mxu0 %v157
    %2537 = vmatprep.subr.mxu0 0.0
    %2538 = vmatpush1.msra.mxu0 %v158
    %2539 = vmatprep.subr.mxu0 0.0
    %2540 = vmatpush1.msra.mxu0 %v159
    %2541 = vmatprep.subr.mxu0 0.0
    %2542 = vmatpush1.msra.mxu0 %v160
    %2543 = vmatprep.subr.mxu0 0.0
    %2544 = vmatpush1.msra.mxu0 %v161
    %2545 = vmatprep.subr.mxu0 0.0
    %2546 = vmatpush1.msra.mxu0 %v162
    %2547 = vmatprep.subr.mxu0 0.0
    %2548 = vmatpush1.msra.mxu0 %v163
    %2549 = vmatprep.subr.mxu0 0.0
    %2550 = vmatpush1.msra.mxu0 0.0
    %2551 = vmatprep.subr.mxu0 0.0
    %2552 = vmatpush1.msra.mxu0 0.0
    %2553 = vmatprep.subr.mxu0 0.0
    %2554 = vmatpush1.msra.mxu0 0.0
    %2555 = vmatprep.subr.mxu0 0.0
    %2556 = vmatpush1.msra.mxu0 0.0
    %2557 = vmatprep.subr.mxu0 0.0
    %2558 = vmatpush1.msra.mxu0 0.0
    %2559 = vmatprep.subr.mxu0 0.0
    %2560 = vmatpush1.msra.mxu0 0.0
    %2561 = vmatprep.subr.mxu0 0.0
    %2562 = vmatpush1.msra.mxu0 0.0
    %2563 = vmatprep.subr.mxu0 0.0
    %2564 = vmatpush1.msra.mxu0 0.0
    %2565 = vmatprep.subr.mxu0 0.0
    %2566 = vmatpush1.msra.mxu0 0.0
    %2567 = vmatprep.subr.mxu0 0.0
    %2568 = vmatpush1.msra.mxu0 0.0
    %2569 = vmatprep.subr.mxu0 0.0
    %2570 = vmatpush1.msra.mxu0 0.0
    %2571 = vmatprep.subr.mxu0 0.0
    %2572 = vmatpush1.msra.mxu0 0.0
    %2573 = vmatprep.subr.mxu0 0.0
    %2574 = vmatpush1.msra.mxu0 0.0
    %2575 = vmatprep.subr.mxu0 0.0
    %2576 = vmatpush1.msra.mxu0 0.0
    %2577 = vmatprep.subr.mxu0 0.0
    %2578 = vmatpush1.msra.mxu0 0.0
    %2579 = vmatprep.subr.mxu0 0.0
    %2580 = vmatpush1.msra.mxu0 0.0
    %2581 = vmatprep.mubr.f32.mxu0 0.0
    %2582 = vmatmul.mubr.f32.gmra.mrb[0].mxu0 %v2507
    %v2583 = vpop.f32.mrb[0].mxu0
    %v2584 = vadd.f32 %v2515, %v2583
    %v2585 = vpop.f32.mrb[0].mxu0
    %2586 = vmatprep.mubr.f32.mxu0 0.0
    %2587 = vmatmul.mubr.f32.gmra.mrb[0].mxu0 %v2510
    %v2588 = vpop.f32.mrb[0].mxu0
    %v2589 = vadd.f32 %v2515, %v2588
    %v2590 = vpop.f32.mrb[0].mxu0
    %2591 = vdwg.mxu0
    %2592 = vst [vmem:[%s7] sm:$0xff] %v2584
    %2593 = vst [vmem:[%s7 + $0x8] sm:$0xff] %v2589
    // Predicated region
    $region30: #{char_rnn_forward.1} parent=1 // pred_check
      _
    $region31: #{char_rnn_forward.1} parent=1 // pred_check_branch
      %2595 = sbr.rel (0) target = $region33
    $region32: #{char_rnn_forward.1} parent=1 // pred_region
      _
    $region33: #{char_rnn_forward.1} parent=1 // pred_fallthru
      _
    // Predicated region
    $region34: #{char_rnn_forward.1} parent=1 // pred_check
      _
    $region35: #{char_rnn_forward.1} parent=1 // pred_check_branch
      %2597 = sbr.rel (0) target = $region37
    $region36: #{char_rnn_forward.1} parent=1 // pred_region
      %s2599 = ssub.s32 128, 128
      %2600 = vsyncadd [#allocation3], %s2599
      %s2601 = sshll.u32 [#allocation2], 4
      %s2602 = int_to_ptr.vmem [resolvable:$true] %s2601
      %2607 = dma.vmem_to_hbm [thread:$0]  %s2602, 128, %s8, [#allocation3], 32, 32, 2
    $region37: #{char_rnn_forward.1} parent=1 // pred_fallthru
      _
    // Predicated region
    $region38: #{char_rnn_forward.1} parent=1 // pred_check
      _
    $region39: #{char_rnn_forward.1} parent=1 // pred_check_branch
      %2609 = sbr.rel (0) target = $region41
    $region40: #{char_rnn_forward.1} parent=1 // pred_region
      _
    $region41: #{char_rnn_forward.1} parent=1 // pred_fallthru
      _
    // Predicated region
    $region42: #{char_rnn_forward.1} parent=1 // pred_check
      _
    $region43: #{char_rnn_forward.1} parent=1 // pred_check_branch
      %2611 = sbr.rel (0) target = $region45
    $region44: #{char_rnn_forward.1} parent=1 // pred_region
      %2612 = dma.done [#allocation3], 128
    $region45: #{char_rnn_forward.1} parent=1 // pred_fallthru
      _
    %2613 = vsyncpa [#allocation3], 1

</llo_original>
